<compile_context>
chip_gen: v5e
topology: v5e:2x2
jax: 0.10.0
libtpu: 0.0.40
codegen_flags: <defaults>
</compile_context>

<pallas_src>
import jax
import jax.numpy as jnp
from jax.experimental import pallas as pl
from jax.experimental.pallas import tpu as pltpu

# ----- synthetic model hyperparameters (small, consistent with the module) -----
VOCAB = 256
HIDDEN = 64
N_HEADS = 2
HEAD_DIM = HIDDEN // N_HEADS
FFN = 128
N_LAYERS = 2
EMB_DIM = 256          # fixed by CodeT5P (self.emb_dim = 256)
OUT_DIM = 8            # output_dim > 0  -> nn.Linear(256, OUT_DIM) is applied
OUT_PAD = 128          # lane-dense padded output width (sliced to OUT_DIM in wrapper)
EPS = 1e-6
NEG_INF = -1e9
SCALE = 1.0 / (HEAD_DIM ** 0.5)

BATCH = 2
SEQ = 16
BS = BATCH * SEQ       # batch rows folded onto the sublane axis


def _rmsnorm(x, g):
    var = jnp.mean(x * x, axis=-1, keepdims=True)
    return x * jax.lax.rsqrt(var + EPS) * g


# ---------------------------------------------------------------------------
# Fused kernel: embedding + full encoder stack + head, one program total
# ---------------------------------------------------------------------------
def fused_forward_kernel(ids_ref, mask_ref, emb_ref, g1_ref, wqkv_ref, wo_ref,
                         g2_ref, w1_ref, w2_ref, gf_ref, wproj_ref, wout_ref,
                         bout_ref, o_ref):
    # ---- embedding gather fused as a one-hot matmul on the MXU (exact in f32)
    ids = ids_ref[...]                                          # [BS, 1] int32
    tok = jax.lax.broadcasted_iota(jnp.int32, (BS, VOCAB), 1)   # [BS, VOCAB]
    onehot = (tok == ids).astype(jnp.float32)
    x = jnp.dot(onehot, emb_ref[...],
                preferred_element_type=jnp.float32)             # [BS, H] f32

    # ---- attention bias: computed & broadcast once (hoisted out of layer loop)
    bias = (1.0 - mask_ref[...]) * NEG_INF                      # [B, S]
    bias_sq = [jnp.broadcast_to(bias[b:b + 1, :], (SEQ, SEQ))   # [S, S] each
               for b in range(BATCH)]

    for l in range(N_LAYERS):                                   # static unroll
        g1 = g1_ref[l]
        wqkv = wqkv_ref[l]
        wo_l = wo_ref[l]
        g2 = g2_ref[l]
        w1 = w1_ref[l]
        w2 = w2_ref[l]

        # --- self-attention sub-block (pre-RMSNorm, residual) ---------------
        xn = _rmsnorm(x, g1).astype(jnp.bfloat16)               # [BS, H]
        qkv = jnp.dot(xn, wqkv,                                 # fused QKV matmul
                      preferred_element_type=jnp.float32)       # [BS, 3H] f32

        deltas = []
        for b in range(BATCH):                                  # per-batch scores
            qkv_b = qkv[b * SEQ:(b + 1) * SEQ, :]               # [S, 3H]
            delta = jnp.zeros((SEQ, HIDDEN), jnp.float32)
            for h in range(N_HEADS):                            # per-head, no transposes
                c = h * HEAD_DIM
                q = qkv_b[:, c:c + HEAD_DIM].astype(jnp.bfloat16)
                k = qkv_b[:, HIDDEN + c:HIDDEN + c + HEAD_DIM].astype(jnp.bfloat16)
                v = qkv_b[:, 2 * HIDDEN + c:2 * HIDDEN + c + HEAD_DIM].astype(jnp.bfloat16)
                s = jax.lax.dot_general(                        # q @ k^T (contract D)
                    q, k, (((1,), (1,)), ((), ())),
                    preferred_element_type=jnp.float32) * SCALE + bias_sq[b]
                s = s - jnp.max(s, axis=-1, keepdims=True)
                p = jnp.exp(s)
                p = p * pl.reciprocal(jnp.sum(p, axis=-1, keepdims=True),
                                      approx=False)             # exact softmax
                ao = jnp.dot(p.astype(jnp.bfloat16), v,
                             preferred_element_type=jnp.float32)        # [S, D]
                delta = delta + jnp.dot(                        # per-head out-proj
                    ao.astype(jnp.bfloat16), wo_l[c:c + HEAD_DIM, :],
                    preferred_element_type=jnp.float32)                 # [S, H]
            deltas.append(delta)
        x = x + jnp.concatenate(deltas, axis=0)                 # [BS, H] residual

        # --- feed-forward sub-block (pre-RMSNorm, ReLU, residual) ------------
        xn2 = _rmsnorm(x, g2).astype(jnp.bfloat16)
        h1 = jnp.maximum(jnp.dot(xn2, w1,
                                 preferred_element_type=jnp.float32), 0.0)
        x = x + jnp.dot(h1.astype(jnp.bfloat16), w2,
                        preferred_element_type=jnp.float32)

    # --- head: token-0 rows stacked -> final RMSNorm -> proj 256 -> L2 -> Linear
    x0 = jnp.concatenate([x[b * SEQ:b * SEQ + 1, :] for b in range(BATCH)],
                         axis=0)                                # [B, H]
    xn = _rmsnorm(x0, gf_ref[...]).astype(jnp.bfloat16)
    e = jnp.dot(xn, wproj_ref[...], preferred_element_type=jnp.float32)  # [B, 256]
    inv = jax.lax.rsqrt(jnp.maximum(jnp.sum(e * e, axis=-1, keepdims=True), 1e-24))
    e = (e * inv).astype(jnp.bfloat16)                          # L2-normalized
    y = jnp.dot(e, wout_ref[...], preferred_element_type=jnp.float32) + bout_ref[...]
    o_ref[...] = y                                              # [B, OUT_PAD] lane-dense


def fused_forward(ids, mask, params):
    ids2d = ids.reshape(BS, 1).astype(jnp.int32)
    maskf = mask.astype(jnp.float32)                            # [B, S]

    def full_spec(shape):
        return pl.BlockSpec(shape, lambda i, n=len(shape): (0,) * n)

    y = pl.pallas_call(
        fused_forward_kernel,
        out_shape=jax.ShapeDtypeStruct((BATCH, OUT_PAD), jnp.float32),
        grid=(1,),
        in_specs=[
            full_spec((BS, 1)),                        # ids (int32, gathered in-kernel)
            full_spec((BATCH, SEQ)),                   # attention mask
            full_spec((VOCAB, HIDDEN)),                # embedding table (VMEM-resident)
            full_spec((N_LAYERS, 1, HIDDEN)),          # g1
            full_spec((N_LAYERS, HIDDEN, 3 * HIDDEN)), # wqkv (fused, bf16)
            full_spec((N_LAYERS, HIDDEN, HIDDEN)),     # wo (bf16)
            full_spec((N_LAYERS, 1, HIDDEN)),          # g2
            full_spec((N_LAYERS, HIDDEN, FFN)),        # w1 (bf16)
            full_spec((N_LAYERS, FFN, HIDDEN)),        # w2 (bf16)
            full_spec((1, HIDDEN)),                    # gf
            full_spec((HIDDEN, EMB_DIM)),              # wproj (bf16)
            full_spec((EMB_DIM, OUT_PAD)),             # wout (bf16, zero-padded)
            full_spec((1, OUT_PAD)),                   # bout (zero-padded)
        ],
        out_specs=pl.BlockSpec((BATCH, OUT_PAD), lambda i: (0, 0)),
        compiler_params=pltpu.CompilerParams(
            dimension_semantics=("arbitrary",)),
    )(ids2d, maskf, params["emb"], params["g1"], params["wqkv"], params["wo"],
      params["g2"], params["w1"], params["w2"], params["gf"], params["wproj"],
      params["wout_pad"], params["bout_pad"])
    return y[:, :OUT_DIM]                                       # [B, OUT_DIM]


# ---------------------------------------------------------------------------
# Parameter init (deterministic, matmul weights pre-cast to bf16) and forward
# ---------------------------------------------------------------------------
def init_params(key):
    keys = jax.random.split(key, 7)
    bf16 = jnp.bfloat16

    def nrm(k, shape):
        return 0.02 * jax.random.normal(k, shape, jnp.float32)

    wout = nrm(keys[6], (EMB_DIM, OUT_DIM))
    return {
        "emb": nrm(keys[0], (VOCAB, HIDDEN)),                   # f32 (exact lookup)
        "g1": jnp.ones((N_LAYERS, 1, HIDDEN), jnp.float32),
        "wqkv": nrm(keys[1], (N_LAYERS, HIDDEN, 3 * HIDDEN)).astype(bf16),
        "wo": nrm(keys[2], (N_LAYERS, HIDDEN, HIDDEN)).astype(bf16),
        "g2": jnp.ones((N_LAYERS, 1, HIDDEN), jnp.float32),
        "w1": nrm(keys[3], (N_LAYERS, HIDDEN, FFN)).astype(bf16),
        "w2": nrm(keys[4], (N_LAYERS, FFN, HIDDEN)).astype(bf16),
        "gf": jnp.ones((1, HIDDEN), jnp.float32),
        "wproj": nrm(keys[5], (HIDDEN, EMB_DIM)).astype(bf16),
        "wout_pad": jnp.pad(wout, ((0, 0), (0, OUT_PAD - OUT_DIM))).astype(bf16),
        "bout_pad": jnp.zeros((1, OUT_PAD), jnp.float32),
    }


def codet5p_forward(params, ids, attention_mask):
    # Entire forward (embedding lookup included) runs inside one pallas_call.
    return fused_forward(ids, attention_mask, params)           # [B, OUT_DIM]


if __name__ == "__main__":
    key = jax.random.PRNGKey(0)
    pkey, ikey = jax.random.split(key)
    params = init_params(pkey)

    ids = jax.random.randint(ikey, (BATCH, SEQ), 0, VOCAB, dtype=jnp.int32)
    # batch 0 fully valid, batch 1 has 4 padded positions at the end
    attention_mask = jnp.concatenate(
        [jnp.ones((1, SEQ), jnp.int32),
         jnp.concatenate([jnp.ones((1, SEQ - 4), jnp.int32),
                          jnp.zeros((1, 4), jnp.int32)], axis=1)], axis=0)

    fwd = jax.jit(codet5p_forward)
    y = fwd(params, ids, attention_mask)
    jax.block_until_ready(y)
    assert y.shape == (BATCH, OUT_DIM) and y.dtype == jnp.float32
    assert bool(jnp.all(jnp.isfinite(y)))
    print("KERNEL_OK")
</pallas_src>

<mosaic_0001>
module attributes {stable_mosaic.version = 11 : i64} {
  func.func @fused_forward_kernel(%arg0: i32, %arg1: memref<32x1xi32, #tpu.memory_space<vmem>>, %arg2: memref<2x16xf32, #tpu.memory_space<vmem>>, %arg3: memref<256x64xf32, #tpu.memory_space<vmem>>, %arg4: memref<2x1x64xf32, #tpu.memory_space<vmem>>, %arg5: memref<2x64x192xbf16, #tpu.memory_space<vmem>>, %arg6: memref<2x64x64xbf16, #tpu.memory_space<vmem>>, %arg7: memref<2x1x64xf32, #tpu.memory_space<vmem>>, %arg8: memref<2x64x128xbf16, #tpu.memory_space<vmem>>, %arg9: memref<2x128x64xbf16, #tpu.memory_space<vmem>>, %arg10: memref<1x64xf32, #tpu.memory_space<vmem>>, %arg11: memref<64x256xbf16, #tpu.memory_space<vmem>>, %arg12: memref<256x128xbf16, #tpu.memory_space<vmem>>, %arg13: memref<1x128xf32, #tpu.memory_space<vmem>>, %arg14: memref<2x128xf32, #tpu.memory_space<vmem>>) attributes {dimension_semantics = [#tpu.dimension_semantics<arbitrary>], iteration_bounds = array<i64: 1>, scalar_prefetch = 0 : i64, scratch_operands = 0 : i64, tpu.core_type = #tpu.core_type<tc>, window_params = [{pipeline_mode = #tpu.pipeline_mode<synchronous>, transform_indices = @transform_0, window_bounds = array<i64: 32, 1>}, {pipeline_mode = #tpu.pipeline_mode<synchronous>, transform_indices = @transform_1, window_bounds = array<i64: 2, 16>}, {pipeline_mode = #tpu.pipeline_mode<synchronous>, transform_indices = @transform_2, window_bounds = array<i64: 256, 64>}, {pipeline_mode = #tpu.pipeline_mode<synchronous>, transform_indices = @transform_3, window_bounds = array<i64: 2, 1, 64>}, {pipeline_mode = #tpu.pipeline_mode<synchronous>, transform_indices = @transform_4, window_bounds = array<i64: 2, 64, 192>}, {pipeline_mode = #tpu.pipeline_mode<synchronous>, transform_indices = @transform_5, window_bounds = array<i64: 2, 64, 64>}, {pipeline_mode = #tpu.pipeline_mode<synchronous>, transform_indices = @transform_6, window_bounds = array<i64: 2, 1, 64>}, {pipeline_mode = #tpu.pipeline_mode<synchronous>, transform_indices = @transform_7, window_bounds = array<i64: 2, 64, 128>}, {pipeline_mode = #tpu.pipeline_mode<synchronous>, transform_indices = @transform_8, window_bounds = array<i64: 2, 128, 64>}, {pipeline_mode = #tpu.pipeline_mode<synchronous>, transform_indices = @transform_9, window_bounds = array<i64: 1, 64>}, {pipeline_mode = #tpu.pipeline_mode<synchronous>, transform_indices = @transform_10, window_bounds = array<i64: 64, 256>}, {pipeline_mode = #tpu.pipeline_mode<synchronous>, transform_indices = @transform_11, window_bounds = array<i64: 256, 128>}, {pipeline_mode = #tpu.pipeline_mode<synchronous>, transform_indices = @transform_12, window_bounds = array<i64: 1, 128>}, {pipeline_mode = #tpu.pipeline_mode<synchronous>, transform_indices = @transform_13, window_bounds = array<i64: 2, 128>}]} {
    %c0 = arith.constant 0 : index
    %c0_0 = arith.constant 0 : index
    %0 = vector.load %arg1[%c0, %c0_0] : memref<32x1xi32, #tpu.memory_space<vmem>>, vector<32x1xi32>
    %1 = tpu.iota {dimensions = array<i32: 1>} : vector<32x256xi32>
    %2 = vector.broadcast %0 : vector<32x1xi32> to vector<32x256xi32>
    %3 = arith.cmpi eq, %1, %2 : vector<32x256xi32>
    %4 = arith.extui %3 : vector<32x256xi1> to vector<32x256xi32>
    %5 = arith.sitofp %4 : vector<32x256xi32> to vector<32x256xf32>
    %c0_1 = arith.constant 0 : index
    %c0_2 = arith.constant 0 : index
    %6 = vector.load %arg3[%c0_1, %c0_2] : memref<256x64xf32, #tpu.memory_space<vmem>>, vector<256x64xf32>
    %cst = arith.constant dense<0.000000e+00> : vector<32x64xf32>
    %7 = tpu.matmul %5, %6, %cst {dimension_numbers = #tpu.dot_dimension_numbers<[1], [0], [0], [1], [0, 0, 1, 1], [], []>} : vector<32x256xf32>, vector<256x64xf32>, vector<32x64xf32> -> vector<32x64xf32>
    %c0_3 = arith.constant 0 : index
    %c0_4 = arith.constant 0 : index
    %8 = vector.load %arg2[%c0_3, %c0_4] : memref<2x16xf32, #tpu.memory_space<vmem>>, vector<2x16xf32>
    %cst_5 = arith.constant 1.000000e+00 : f32
    %9 = vector.broadcast %cst_5 : f32 to vector<2x16xf32>
    %10 = arith.subf %9, %8 : vector<2x16xf32>
    %cst_6 = arith.constant -1.000000e+09 : f32
    %11 = vector.broadcast %cst_6 : f32 to vector<2x16xf32>
    %12 = arith.mulf %10, %11 : vector<2x16xf32>
    %13 = vector.extract_strided_slice %12 {offsets = [0, 0], sizes = [1, 16], strides = [1, 1]} : vector<2x16xf32> to vector<1x16xf32>
    %14 = vector.shape_cast %13 : vector<1x16xf32> to vector<1x16xf32>
    %15 = vector.broadcast %14 : vector<1x16xf32> to vector<16x16xf32>
    %16 = vector.extract_strided_slice %12 {offsets = [1, 0], sizes = [1, 16], strides = [1, 1]} : vector<2x16xf32> to vector<1x16xf32>
    %17 = vector.shape_cast %16 : vector<1x16xf32> to vector<1x16xf32>
    %18 = vector.broadcast %17 : vector<1x16xf32> to vector<16x16xf32>
    %c0_7 = arith.constant 0 : index
    %c0_8 = arith.constant 0 : index
    %c0_9 = arith.constant 0 : index
    %19 = vector.load %arg4[%c0_7, %c0_8, %c0_9] : memref<2x1x64xf32, #tpu.memory_space<vmem>>, vector<1x1x64xf32>
    %20 = vector.shape_cast %19 : vector<1x1x64xf32> to vector<1x64xf32>
    %c0_10 = arith.constant 0 : index
    %c0_11 = arith.constant 0 : index
    %c0_12 = arith.constant 0 : index
    %21 = vector.load %arg5[%c0_10, %c0_11, %c0_12] : memref<2x64x192xbf16, #tpu.memory_space<vmem>>, vector<1x64x192xbf16>
    %22 = vector.shape_cast %21 : vector<1x64x192xbf16> to vector<64x192xbf16>
    %c0_13 = arith.constant 0 : index
    %c0_14 = arith.constant 0 : index
    %c0_15 = arith.constant 0 : index
    %23 = vector.load %arg6[%c0_13, %c0_14, %c0_15] : memref<2x64x64xbf16, #tpu.memory_space<vmem>>, vector<1x64x64xbf16>
    %24 = vector.shape_cast %23 : vector<1x64x64xbf16> to vector<64x64xbf16>
    %c0_16 = arith.constant 0 : index
    %c0_17 = arith.constant 0 : index
    %c0_18 = arith.constant 0 : index
    %25 = vector.load %arg7[%c0_16, %c0_17, %c0_18] : memref<2x1x64xf32, #tpu.memory_space<vmem>>, vector<1x1x64xf32>
    %26 = vector.shape_cast %25 : vector<1x1x64xf32> to vector<1x64xf32>
    %c0_19 = arith.constant 0 : index
    %c0_20 = arith.constant 0 : index
    %c0_21 = arith.constant 0 : index
    %27 = vector.load %arg8[%c0_19, %c0_20, %c0_21] : memref<2x64x128xbf16, #tpu.memory_space<vmem>>, vector<1x64x128xbf16>
    %28 = vector.shape_cast %27 : vector<1x64x128xbf16> to vector<64x128xbf16>
    %c0_22 = arith.constant 0 : index
    %c0_23 = arith.constant 0 : index
    %c0_24 = arith.constant 0 : index
    %29 = vector.load %arg9[%c0_22, %c0_23, %c0_24] : memref<2x128x64xbf16, #tpu.memory_space<vmem>>, vector<1x128x64xbf16>
    %30 = vector.shape_cast %29 : vector<1x128x64xbf16> to vector<128x64xbf16>
    %31 = arith.mulf %7, %7 : vector<32x64xf32>
    %cst_25 = arith.constant dense<0.000000e+00> : vector<32xf32>
    %32 = vector.multi_reduction <add>, %31, %cst_25 [1] : vector<32x64xf32> to vector<32xf32>
    %33 = vector.shape_cast %32 : vector<32xf32> to vector<32x1xf32>
    %cst_26 = arith.constant 6.400000e+01 : f32
    %34 = vector.broadcast %cst_26 : f32 to vector<32x1xf32>
    %35 = arith.divf %33, %34 : vector<32x1xf32>
    %cst_27 = arith.constant 9.99999997E-7 : f32
    %36 = vector.broadcast %cst_27 : f32 to vector<32x1xf32>
    %37 = arith.addf %35, %36 : vector<32x1xf32>
    %38 = math.rsqrt %37 : vector<32x1xf32>
    %39 = vector.broadcast %38 : vector<32x1xf32> to vector<32x64xf32>
    %40 = arith.mulf %7, %39 : vector<32x64xf32>
    %41 = vector.broadcast %20 : vector<1x64xf32> to vector<32x64xf32>
    %42 = arith.mulf %40, %41 : vector<32x64xf32>
    %43 = arith.truncf %42 : vector<32x64xf32> to vector<32x64xbf16>
    %cst_28 = arith.constant dense<0.000000e+00> : vector<32x192xf32>
    %44 = tpu.matmul %43, %22, %cst_28 {dimension_numbers = #tpu.dot_dimension_numbers<[1], [0], [0], [1], [0, 0, 1, 1], [], []>} : vector<32x64xbf16>, vector<64x192xbf16>, vector<32x192xf32> -> vector<32x192xf32>
    %45 = vector.extract_strided_slice %44 {offsets = [0, 0], sizes = [16, 192], strides = [1, 1]} : vector<32x192xf32> to vector<16x192xf32>
    %cst_29 = arith.constant 0.000000e+00 : f32
    %46 = vector.broadcast %cst_29 : f32 to vector<16x64xf32>
    %47 = vector.extract_strided_slice %45 {offsets = [0, 0], sizes = [16, 32], strides = [1, 1]} : vector<16x192xf32> to vector<16x32xf32>
    %48 = arith.truncf %47 : vector<16x32xf32> to vector<16x32xbf16>
    %49 = vector.extract_strided_slice %45 {offsets = [0, 64], sizes = [16, 32], strides = [1, 1]} : vector<16x192xf32> to vector<16x32xf32>
    %50 = arith.truncf %49 : vector<16x32xf32> to vector<16x32xbf16>
    %51 = vector.extract_strided_slice %45 {offsets = [0, 128], sizes = [16, 32], strides = [1, 1]} : vector<16x192xf32> to vector<16x32xf32>
    %52 = arith.truncf %51 : vector<16x32xf32> to vector<16x32xbf16>
    %cst_30 = arith.constant dense<0.000000e+00> : vector<16x16xf32>
    %53 = tpu.matmul %48, %50, %cst_30 {dimension_numbers = #tpu.dot_dimension_numbers<[1], [1], [0], [0], [0, 0, 1, 0], [], []>} : vector<16x32xbf16>, vector<16x32xbf16>, vector<16x16xf32> -> vector<16x16xf32>
    %cst_31 = arith.constant 0.176776692 : f32
    %54 = vector.broadcast %cst_31 : f32 to vector<16x16xf32>
    %55 = arith.mulf %53, %54 : vector<16x16xf32>
    %56 = arith.addf %55, %15 : vector<16x16xf32>
    %cst_32 = arith.constant dense<0xFF800000> : vector<16xf32>
    %57 = vector.multi_reduction <maximumf>, %56, %cst_32 [1] : vector<16x16xf32> to vector<16xf32>
    %58 = vector.shape_cast %57 : vector<16xf32> to vector<16x1xf32>
    %59 = vector.broadcast %58 : vector<16x1xf32> to vector<16x16xf32>
    %60 = arith.subf %56, %59 : vector<16x16xf32>
    %61 = math.exp %60 : vector<16x16xf32>
    %cst_33 = arith.constant dense<0.000000e+00> : vector<16xf32>
    %62 = vector.multi_reduction <add>, %61, %cst_33 [1] : vector<16x16xf32> to vector<16xf32>
    %63 = vector.shape_cast %62 : vector<16xf32> to vector<16x1xf32>
    %64 = tpu.reciprocal %63 : vector<16x1xf32> -> vector<16x1xf32>
    %65 = vector.broadcast %64 : vector<16x1xf32> to vector<16x16xf32>
    %66 = arith.mulf %61, %65 : vector<16x16xf32>
    %67 = arith.truncf %66 : vector<16x16xf32> to vector<16x16xbf16>
    %cst_34 = arith.constant dense<0.000000e+00> : vector<16x32xf32>
    %68 = tpu.matmul %67, %52, %cst_34 {dimension_numbers = #tpu.dot_dimension_numbers<[1], [0], [0], [1], [0, 0, 1, 1], [], []>} : vector<16x16xbf16>, vector<16x32xbf16>, vector<16x32xf32> -> vector<16x32xf32>
    %69 = arith.truncf %68 : vector<16x32xf32> to vector<16x32xbf16>
    %70 = vector.extract_strided_slice %24 {offsets = [0, 0], sizes = [32, 64], strides = [1, 1]} : vector<64x64xbf16> to vector<32x64xbf16>
    %cst_35 = arith.constant dense<0.000000e+00> : vector<16x64xf32>
    %71 = tpu.matmul %69, %70, %cst_35 {dimension_numbers = #tpu.dot_dimension_numbers<[1], [0], [0], [1], [0, 0, 1, 1], [], []>} : vector<16x32xbf16>, vector<32x64xbf16>, vector<16x64xf32> -> vector<16x64xf32>
    %72 = arith.addf %46, %71 : vector<16x64xf32>
    %73 = vector.extract_strided_slice %45 {offsets = [0, 32], sizes = [16, 32], strides = [1, 1]} : vector<16x192xf32> to vector<16x32xf32>
    %74 = arith.truncf %73 : vector<16x32xf32> to vector<16x32xbf16>
    %75 = vector.extract_strided_slice %45 {offsets = [0, 96], sizes = [16, 32], strides = [1, 1]} : vector<16x192xf32> to vector<16x32xf32>
    %76 = arith.truncf %75 : vector<16x32xf32> to vector<16x32xbf16>
    %77 = vector.extract_strided_slice %45 {offsets = [0, 160], sizes = [16, 32], strides = [1, 1]} : vector<16x192xf32> to vector<16x32xf32>
    %78 = arith.truncf %77 : vector<16x32xf32> to vector<16x32xbf16>
    %cst_36 = arith.constant dense<0.000000e+00> : vector<16x16xf32>
    %79 = tpu.matmul %74, %76, %cst_36 {dimension_numbers = #tpu.dot_dimension_numbers<[1], [1], [0], [0], [0, 0, 1, 0], [], []>} : vector<16x32xbf16>, vector<16x32xbf16>, vector<16x16xf32> -> vector<16x16xf32>
    %cst_37 = arith.constant 0.176776692 : f32
    %80 = vector.broadcast %cst_37 : f32 to vector<16x16xf32>
    %81 = arith.mulf %79, %80 : vector<16x16xf32>
    %82 = arith.addf %81, %15 : vector<16x16xf32>
    %cst_38 = arith.constant dense<0xFF800000> : vector<16xf32>
    %83 = vector.multi_reduction <maximumf>, %82, %cst_38 [1] : vector<16x16xf32> to vector<16xf32>
    %84 = vector.shape_cast %83 : vector<16xf32> to vector<16x1xf32>
    %85 = vector.broadcast %84 : vector<16x1xf32> to vector<16x16xf32>
    %86 = arith.subf %82, %85 : vector<16x16xf32>
    %87 = math.exp %86 : vector<16x16xf32>
    %cst_39 = arith.constant dense<0.000000e+00> : vector<16xf32>
    %88 = vector.multi_reduction <add>, %87, %cst_39 [1] : vector<16x16xf32> to vector<16xf32>
    %89 = vector.shape_cast %88 : vector<16xf32> to vector<16x1xf32>
    %90 = tpu.reciprocal %89 : vector<16x1xf32> -> vector<16x1xf32>
    %91 = vector.broadcast %90 : vector<16x1xf32> to vector<16x16xf32>
    %92 = arith.mulf %87, %91 : vector<16x16xf32>
    %93 = arith.truncf %92 : vector<16x16xf32> to vector<16x16xbf16>
    %cst_40 = arith.constant dense<0.000000e+00> : vector<16x32xf32>
    %94 = tpu.matmul %93, %78, %cst_40 {dimension_numbers = #tpu.dot_dimension_numbers<[1], [0], [0], [1], [0, 0, 1, 1], [], []>} : vector<16x16xbf16>, vector<16x32xbf16>, vector<16x32xf32> -> vector<16x32xf32>
    %95 = arith.truncf %94 : vector<16x32xf32> to vector<16x32xbf16>
    %96 = vector.extract_strided_slice %24 {offsets = [32, 0], sizes = [32, 64], strides = [1, 1]} : vector<64x64xbf16> to vector<32x64xbf16>
    %cst_41 = arith.constant dense<0.000000e+00> : vector<16x64xf32>
    %97 = tpu.matmul %95, %96, %cst_41 {dimension_numbers = #tpu.dot_dimension_numbers<[1], [0], [0], [1], [0, 0, 1, 1], [], []>} : vector<16x32xbf16>, vector<32x64xbf16>, vector<16x64xf32> -> vector<16x64xf32>
    %98 = arith.addf %72, %97 : vector<16x64xf32>
    %99 = vector.extract_strided_slice %44 {offsets = [16, 0], sizes = [16, 192], strides = [1, 1]} : vector<32x192xf32> to vector<16x192xf32>
    %cst_42 = arith.constant 0.000000e+00 : f32
    %100 = vector.broadcast %cst_42 : f32 to vector<16x64xf32>
    %101 = vector.extract_strided_slice %99 {offsets = [0, 0], sizes = [16, 32], strides = [1, 1]} : vector<16x192xf32> to vector<16x32xf32>
    %102 = arith.truncf %101 : vector<16x32xf32> to vector<16x32xbf16>
    %103 = vector.extract_strided_slice %99 {offsets = [0, 64], sizes = [16, 32], strides = [1, 1]} : vector<16x192xf32> to vector<16x32xf32>
    %104 = arith.truncf %103 : vector<16x32xf32> to vector<16x32xbf16>
    %105 = vector.extract_strided_slice %99 {offsets = [0, 128], sizes = [16, 32], strides = [1, 1]} : vector<16x192xf32> to vector<16x32xf32>
    %106 = arith.truncf %105 : vector<16x32xf32> to vector<16x32xbf16>
    %cst_43 = arith.constant dense<0.000000e+00> : vector<16x16xf32>
    %107 = tpu.matmul %102, %104, %cst_43 {dimension_numbers = #tpu.dot_dimension_numbers<[1], [1], [0], [0], [0, 0, 1, 0], [], []>} : vector<16x32xbf16>, vector<16x32xbf16>, vector<16x16xf32> -> vector<16x16xf32>
    %cst_44 = arith.constant 0.176776692 : f32
    %108 = vector.broadcast %cst_44 : f32 to vector<16x16xf32>
    %109 = arith.mulf %107, %108 : vector<16x16xf32>
    %110 = arith.addf %109, %18 : vector<16x16xf32>
    %cst_45 = arith.constant dense<0xFF800000> : vector<16xf32>
    %111 = vector.multi_reduction <maximumf>, %110, %cst_45 [1] : vector<16x16xf32> to vector<16xf32>
    %112 = vector.shape_cast %111 : vector<16xf32> to vector<16x1xf32>
    %113 = vector.broadcast %112 : vector<16x1xf32> to vector<16x16xf32>
    %114 = arith.subf %110, %113 : vector<16x16xf32>
    %115 = math.exp %114 : vector<16x16xf32>
    %cst_46 = arith.constant dense<0.000000e+00> : vector<16xf32>
    %116 = vector.multi_reduction <add>, %115, %cst_46 [1] : vector<16x16xf32> to vector<16xf32>
    %117 = vector.shape_cast %116 : vector<16xf32> to vector<16x1xf32>
    %118 = tpu.reciprocal %117 : vector<16x1xf32> -> vector<16x1xf32>
    %119 = vector.broadcast %118 : vector<16x1xf32> to vector<16x16xf32>
    %120 = arith.mulf %115, %119 : vector<16x16xf32>
    %121 = arith.truncf %120 : vector<16x16xf32> to vector<16x16xbf16>
    %cst_47 = arith.constant dense<0.000000e+00> : vector<16x32xf32>
    %122 = tpu.matmul %121, %106, %cst_47 {dimension_numbers = #tpu.dot_dimension_numbers<[1], [0], [0], [1], [0, 0, 1, 1], [], []>} : vector<16x16xbf16>, vector<16x32xbf16>, vector<16x32xf32> -> vector<16x32xf32>
    %123 = arith.truncf %122 : vector<16x32xf32> to vector<16x32xbf16>
    %124 = vector.extract_strided_slice %24 {offsets = [0, 0], sizes = [32, 64], strides = [1, 1]} : vector<64x64xbf16> to vector<32x64xbf16>
    %cst_48 = arith.constant dense<0.000000e+00> : vector<16x64xf32>
    %125 = tpu.matmul %123, %124, %cst_48 {dimension_numbers = #tpu.dot_dimension_numbers<[1], [0], [0], [1], [0, 0, 1, 1], [], []>} : vector<16x32xbf16>, vector<32x64xbf16>, vector<16x64xf32> -> vector<16x64xf32>
    %126 = arith.addf %100, %125 : vector<16x64xf32>
    %127 = vector.extract_strided_slice %99 {offsets = [0, 32], sizes = [16, 32], strides = [1, 1]} : vector<16x192xf32> to vector<16x32xf32>
    %128 = arith.truncf %127 : vector<16x32xf32> to vector<16x32xbf16>
    %129 = vector.extract_strided_slice %99 {offsets = [0, 96], sizes = [16, 32], strides = [1, 1]} : vector<16x192xf32> to vector<16x32xf32>
    %130 = arith.truncf %129 : vector<16x32xf32> to vector<16x32xbf16>
    %131 = vector.extract_strided_slice %99 {offsets = [0, 160], sizes = [16, 32], strides = [1, 1]} : vector<16x192xf32> to vector<16x32xf32>
    %132 = arith.truncf %131 : vector<16x32xf32> to vector<16x32xbf16>
    %cst_49 = arith.constant dense<0.000000e+00> : vector<16x16xf32>
    %133 = tpu.matmul %128, %130, %cst_49 {dimension_numbers = #tpu.dot_dimension_numbers<[1], [1], [0], [0], [0, 0, 1, 0], [], []>} : vector<16x32xbf16>, vector<16x32xbf16>, vector<16x16xf32> -> vector<16x16xf32>
    %cst_50 = arith.constant 0.176776692 : f32
    %134 = vector.broadcast %cst_50 : f32 to vector<16x16xf32>
    %135 = arith.mulf %133, %134 : vector<16x16xf32>
    %136 = arith.addf %135, %18 : vector<16x16xf32>
    %cst_51 = arith.constant dense<0xFF800000> : vector<16xf32>
    %137 = vector.multi_reduction <maximumf>, %136, %cst_51 [1] : vector<16x16xf32> to vector<16xf32>
    %138 = vector.shape_cast %137 : vector<16xf32> to vector<16x1xf32>
    %139 = vector.broadcast %138 : vector<16x1xf32> to vector<16x16xf32>
    %140 = arith.subf %136, %139 : vector<16x16xf32>
    %141 = math.exp %140 : vector<16x16xf32>
    %cst_52 = arith.constant dense<0.000000e+00> : vector<16xf32>
    %142 = vector.multi_reduction <add>, %141, %cst_52 [1] : vector<16x16xf32> to vector<16xf32>
    %143 = vector.shape_cast %142 : vector<16xf32> to vector<16x1xf32>
    %144 = tpu.reciprocal %143 : vector<16x1xf32> -> vector<16x1xf32>
    %145 = vector.broadcast %144 : vector<16x1xf32> to vector<16x16xf32>
    %146 = arith.mulf %141, %145 : vector<16x16xf32>
    %147 = arith.truncf %146 : vector<16x16xf32> to vector<16x16xbf16>
    %cst_53 = arith.constant dense<0.000000e+00> : vector<16x32xf32>
    %148 = tpu.matmul %147, %132, %cst_53 {dimension_numbers = #tpu.dot_dimension_numbers<[1], [0], [0], [1], [0, 0, 1, 1], [], []>} : vector<16x16xbf16>, vector<16x32xbf16>, vector<16x32xf32> -> vector<16x32xf32>
    %149 = arith.truncf %148 : vector<16x32xf32> to vector<16x32xbf16>
    %150 = vector.extract_strided_slice %24 {offsets = [32, 0], sizes = [32, 64], strides = [1, 1]} : vector<64x64xbf16> to vector<32x64xbf16>
    %cst_54 = arith.constant dense<0.000000e+00> : vector<16x64xf32>
    %151 = tpu.matmul %149, %150, %cst_54 {dimension_numbers = #tpu.dot_dimension_numbers<[1], [0], [0], [1], [0, 0, 1, 1], [], []>} : vector<16x32xbf16>, vector<32x64xbf16>, vector<16x64xf32> -> vector<16x64xf32>
    %152 = arith.addf %126, %151 : vector<16x64xf32>
    %153 = tpu.concatenate %98, %152 in 0 : vector<16x64xf32>, vector<16x64xf32> -> vector<32x64xf32>
    %154 = arith.addf %7, %153 : vector<32x64xf32>
    %155 = arith.mulf %154, %154 : vector<32x64xf32>
    %cst_55 = arith.constant dense<0.000000e+00> : vector<32xf32>
    %156 = vector.multi_reduction <add>, %155, %cst_55 [1] : vector<32x64xf32> to vector<32xf32>
    %157 = vector.shape_cast %156 : vector<32xf32> to vector<32x1xf32>
    %cst_56 = arith.constant 6.400000e+01 : f32
    %158 = vector.broadcast %cst_56 : f32 to vector<32x1xf32>
    %159 = arith.divf %157, %158 : vector<32x1xf32>
    %cst_57 = arith.constant 9.99999997E-7 : f32
    %160 = vector.broadcast %cst_57 : f32 to vector<32x1xf32>
    %161 = arith.addf %159, %160 : vector<32x1xf32>
    %162 = math.rsqrt %161 : vector<32x1xf32>
    %163 = vector.broadcast %162 : vector<32x1xf32> to vector<32x64xf32>
    %164 = arith.mulf %154, %163 : vector<32x64xf32>
    %165 = vector.broadcast %26 : vector<1x64xf32> to vector<32x64xf32>
    %166 = arith.mulf %164, %165 : vector<32x64xf32>
    %167 = arith.truncf %166 : vector<32x64xf32> to vector<32x64xbf16>
    %cst_58 = arith.constant dense<0.000000e+00> : vector<32x128xf32>
    %168 = tpu.matmul %167, %28, %cst_58 {dimension_numbers = #tpu.dot_dimension_numbers<[1], [0], [0], [1], [0, 0, 1, 1], [], []>} : vector<32x64xbf16>, vector<64x128xbf16>, vector<32x128xf32> -> vector<32x128xf32>
    %cst_59 = arith.constant 0.000000e+00 : f32
    %169 = vector.broadcast %cst_59 : f32 to vector<32x128xf32>
    %170 = arith.maximumf %168, %169 : vector<32x128xf32>
    %171 = arith.truncf %170 : vector<32x128xf32> to vector<32x128xbf16>
    %cst_60 = arith.constant dense<0.000000e+00> : vector<32x64xf32>
    %172 = tpu.matmul %171, %30, %cst_60 {dimension_numbers = #tpu.dot_dimension_numbers<[1], [0], [0], [1], [0, 0, 1, 1], [], []>} : vector<32x128xbf16>, vector<128x64xbf16>, vector<32x64xf32> -> vector<32x64xf32>
    %173 = arith.addf %154, %172 : vector<32x64xf32>
    %c1 = arith.constant 1 : index
    %c0_61 = arith.constant 0 : index
    %c0_62 = arith.constant 0 : index
    %174 = vector.load %arg4[%c1, %c0_61, %c0_62] : memref<2x1x64xf32, #tpu.memory_space<vmem>>, vector<1x1x64xf32>
    %175 = vector.shape_cast %174 : vector<1x1x64xf32> to vector<1x64xf32>
    %c1_63 = arith.constant 1 : index
    %c0_64 = arith.constant 0 : index
    %c0_65 = arith.constant 0 : index
    %176 = vector.load %arg5[%c1_63, %c0_64, %c0_65] : memref<2x64x192xbf16, #tpu.memory_space<vmem>>, vector<1x64x192xbf16>
    %177 = vector.shape_cast %176 : vector<1x64x192xbf16> to vector<64x192xbf16>
    %c1_66 = arith.constant 1 : index
    %c0_67 = arith.constant 0 : index
    %c0_68 = arith.constant 0 : index
    %178 = vector.load %arg6[%c1_66, %c0_67, %c0_68] : memref<2x64x64xbf16, #tpu.memory_space<vmem>>, vector<1x64x64xbf16>
    %179 = vector.shape_cast %178 : vector<1x64x64xbf16> to vector<64x64xbf16>
    %c1_69 = arith.constant 1 : index
    %c0_70 = arith.constant 0 : index
    %c0_71 = arith.constant 0 : index
    %180 = vector.load %arg7[%c1_69, %c0_70, %c0_71] : memref<2x1x64xf32, #tpu.memory_space<vmem>>, vector<1x1x64xf32>
    %181 = vector.shape_cast %180 : vector<1x1x64xf32> to vector<1x64xf32>
    %c1_72 = arith.constant 1 : index
    %c0_73 = arith.constant 0 : index
    %c0_74 = arith.constant 0 : index
    %182 = vector.load %arg8[%c1_72, %c0_73, %c0_74] : memref<2x64x128xbf16, #tpu.memory_space<vmem>>, vector<1x64x128xbf16>
    %183 = vector.shape_cast %182 : vector<1x64x128xbf16> to vector<64x128xbf16>
    %c1_75 = arith.constant 1 : index
    %c0_76 = arith.constant 0 : index
    %c0_77 = arith.constant 0 : index
    %184 = vector.load %arg9[%c1_75, %c0_76, %c0_77] : memref<2x128x64xbf16, #tpu.memory_space<vmem>>, vector<1x128x64xbf16>
    %185 = vector.shape_cast %184 : vector<1x128x64xbf16> to vector<128x64xbf16>
    %186 = arith.mulf %173, %173 : vector<32x64xf32>
    %cst_78 = arith.constant dense<0.000000e+00> : vector<32xf32>
    %187 = vector.multi_reduction <add>, %186, %cst_78 [1] : vector<32x64xf32> to vector<32xf32>
    %188 = vector.shape_cast %187 : vector<32xf32> to vector<32x1xf32>
    %cst_79 = arith.constant 6.400000e+01 : f32
    %189 = vector.broadcast %cst_79 : f32 to vector<32x1xf32>
    %190 = arith.divf %188, %189 : vector<32x1xf32>
    %cst_80 = arith.constant 9.99999997E-7 : f32
    %191 = vector.broadcast %cst_80 : f32 to vector<32x1xf32>
    %192 = arith.addf %190, %191 : vector<32x1xf32>
    %193 = math.rsqrt %192 : vector<32x1xf32>
    %194 = vector.broadcast %193 : vector<32x1xf32> to vector<32x64xf32>
    %195 = arith.mulf %173, %194 : vector<32x64xf32>
    %196 = vector.broadcast %175 : vector<1x64xf32> to vector<32x64xf32>
    %197 = arith.mulf %195, %196 : vector<32x64xf32>
    %198 = arith.truncf %197 : vector<32x64xf32> to vector<32x64xbf16>
    %cst_81 = arith.constant dense<0.000000e+00> : vector<32x192xf32>
    %199 = tpu.matmul %198, %177, %cst_81 {dimension_numbers = #tpu.dot_dimension_numbers<[1], [0], [0], [1], [0, 0, 1, 1], [], []>} : vector<32x64xbf16>, vector<64x192xbf16>, vector<32x192xf32> -> vector<32x192xf32>
    %200 = vector.extract_strided_slice %199 {offsets = [0, 0], sizes = [16, 192], strides = [1, 1]} : vector<32x192xf32> to vector<16x192xf32>
    %cst_82 = arith.constant 0.000000e+00 : f32
    %201 = vector.broadcast %cst_82 : f32 to vector<16x64xf32>
    %202 = vector.extract_strided_slice %200 {offsets = [0, 0], sizes = [16, 32], strides = [1, 1]} : vector<16x192xf32> to vector<16x32xf32>
    %203 = arith.truncf %202 : vector<16x32xf32> to vector<16x32xbf16>
    %204 = vector.extract_strided_slice %200 {offsets = [0, 64], sizes = [16, 32], strides = [1, 1]} : vector<16x192xf32> to vector<16x32xf32>
    %205 = arith.truncf %204 : vector<16x32xf32> to vector<16x32xbf16>
    %206 = vector.extract_strided_slice %200 {offsets = [0, 128], sizes = [16, 32], strides = [1, 1]} : vector<16x192xf32> to vector<16x32xf32>
    %207 = arith.truncf %206 : vector<16x32xf32> to vector<16x32xbf16>
    %cst_83 = arith.constant dense<0.000000e+00> : vector<16x16xf32>
    %208 = tpu.matmul %203, %205, %cst_83 {dimension_numbers = #tpu.dot_dimension_numbers<[1], [1], [0], [0], [0, 0, 1, 0], [], []>} : vector<16x32xbf16>, vector<16x32xbf16>, vector<16x16xf32> -> vector<16x16xf32>
    %cst_84 = arith.constant 0.176776692 : f32
    %209 = vector.broadcast %cst_84 : f32 to vector<16x16xf32>
    %210 = arith.mulf %208, %209 : vector<16x16xf32>
    %211 = arith.addf %210, %15 : vector<16x16xf32>
    %cst_85 = arith.constant dense<0xFF800000> : vector<16xf32>
    %212 = vector.multi_reduction <maximumf>, %211, %cst_85 [1] : vector<16x16xf32> to vector<16xf32>
    %213 = vector.shape_cast %212 : vector<16xf32> to vector<16x1xf32>
    %214 = vector.broadcast %213 : vector<16x1xf32> to vector<16x16xf32>
    %215 = arith.subf %211, %214 : vector<16x16xf32>
    %216 = math.exp %215 : vector<16x16xf32>
    %cst_86 = arith.constant dense<0.000000e+00> : vector<16xf32>
    %217 = vector.multi_reduction <add>, %216, %cst_86 [1] : vector<16x16xf32> to vector<16xf32>
    %218 = vector.shape_cast %217 : vector<16xf32> to vector<16x1xf32>
    %219 = tpu.reciprocal %218 : vector<16x1xf32> -> vector<16x1xf32>
    %220 = vector.broadcast %219 : vector<16x1xf32> to vector<16x16xf32>
    %221 = arith.mulf %216, %220 : vector<16x16xf32>
    %222 = arith.truncf %221 : vector<16x16xf32> to vector<16x16xbf16>
    %cst_87 = arith.constant dense<0.000000e+00> : vector<16x32xf32>
    %223 = tpu.matmul %222, %207, %cst_87 {dimension_numbers = #tpu.dot_dimension_numbers<[1], [0], [0], [1], [0, 0, 1, 1], [], []>} : vector<16x16xbf16>, vector<16x32xbf16>, vector<16x32xf32> -> vector<16x32xf32>
    %224 = arith.truncf %223 : vector<16x32xf32> to vector<16x32xbf16>
    %225 = vector.extract_strided_slice %179 {offsets = [0, 0], sizes = [32, 64], strides = [1, 1]} : vector<64x64xbf16> to vector<32x64xbf16>
    %cst_88 = arith.constant dense<0.000000e+00> : vector<16x64xf32>
    %226 = tpu.matmul %224, %225, %cst_88 {dimension_numbers = #tpu.dot_dimension_numbers<[1], [0], [0], [1], [0, 0, 1, 1], [], []>} : vector<16x32xbf16>, vector<32x64xbf16>, vector<16x64xf32> -> vector<16x64xf32>
    %227 = arith.addf %201, %226 : vector<16x64xf32>
    %228 = vector.extract_strided_slice %200 {offsets = [0, 32], sizes = [16, 32], strides = [1, 1]} : vector<16x192xf32> to vector<16x32xf32>
    %229 = arith.truncf %228 : vector<16x32xf32> to vector<16x32xbf16>
    %230 = vector.extract_strided_slice %200 {offsets = [0, 96], sizes = [16, 32], strides = [1, 1]} : vector<16x192xf32> to vector<16x32xf32>
    %231 = arith.truncf %230 : vector<16x32xf32> to vector<16x32xbf16>
    %232 = vector.extract_strided_slice %200 {offsets = [0, 160], sizes = [16, 32], strides = [1, 1]} : vector<16x192xf32> to vector<16x32xf32>
    %233 = arith.truncf %232 : vector<16x32xf32> to vector<16x32xbf16>
    %cst_89 = arith.constant dense<0.000000e+00> : vector<16x16xf32>
    %234 = tpu.matmul %229, %231, %cst_89 {dimension_numbers = #tpu.dot_dimension_numbers<[1], [1], [0], [0], [0, 0, 1, 0], [], []>} : vector<16x32xbf16>, vector<16x32xbf16>, vector<16x16xf32> -> vector<16x16xf32>
    %cst_90 = arith.constant 0.176776692 : f32
    %235 = vector.broadcast %cst_90 : f32 to vector<16x16xf32>
    %236 = arith.mulf %234, %235 : vector<16x16xf32>
    %237 = arith.addf %236, %15 : vector<16x16xf32>
    %cst_91 = arith.constant dense<0xFF800000> : vector<16xf32>
    %238 = vector.multi_reduction <maximumf>, %237, %cst_91 [1] : vector<16x16xf32> to vector<16xf32>
    %239 = vector.shape_cast %238 : vector<16xf32> to vector<16x1xf32>
    %240 = vector.broadcast %239 : vector<16x1xf32> to vector<16x16xf32>
    %241 = arith.subf %237, %240 : vector<16x16xf32>
    %242 = math.exp %241 : vector<16x16xf32>
    %cst_92 = arith.constant dense<0.000000e+00> : vector<16xf32>
    %243 = vector.multi_reduction <add>, %242, %cst_92 [1] : vector<16x16xf32> to vector<16xf32>
    %244 = vector.shape_cast %243 : vector<16xf32> to vector<16x1xf32>
    %245 = tpu.reciprocal %244 : vector<16x1xf32> -> vector<16x1xf32>
    %246 = vector.broadcast %245 : vector<16x1xf32> to vector<16x16xf32>
    %247 = arith.mulf %242, %246 : vector<16x16xf32>
    %248 = arith.truncf %247 : vector<16x16xf32> to vector<16x16xbf16>
    %cst_93 = arith.constant dense<0.000000e+00> : vector<16x32xf32>
    %249 = tpu.matmul %248, %233, %cst_93 {dimension_numbers = #tpu.dot_dimension_numbers<[1], [0], [0], [1], [0, 0, 1, 1], [], []>} : vector<16x16xbf16>, vector<16x32xbf16>, vector<16x32xf32> -> vector<16x32xf32>
    %250 = arith.truncf %249 : vector<16x32xf32> to vector<16x32xbf16>
    %251 = vector.extract_strided_slice %179 {offsets = [32, 0], sizes = [32, 64], strides = [1, 1]} : vector<64x64xbf16> to vector<32x64xbf16>
    %cst_94 = arith.constant dense<0.000000e+00> : vector<16x64xf32>
    %252 = tpu.matmul %250, %251, %cst_94 {dimension_numbers = #tpu.dot_dimension_numbers<[1], [0], [0], [1], [0, 0, 1, 1], [], []>} : vector<16x32xbf16>, vector<32x64xbf16>, vector<16x64xf32> -> vector<16x64xf32>
    %253 = arith.addf %227, %252 : vector<16x64xf32>
    %254 = vector.extract_strided_slice %199 {offsets = [16, 0], sizes = [16, 192], strides = [1, 1]} : vector<32x192xf32> to vector<16x192xf32>
    %cst_95 = arith.constant 0.000000e+00 : f32
    %255 = vector.broadcast %cst_95 : f32 to vector<16x64xf32>
    %256 = vector.extract_strided_slice %254 {offsets = [0, 0], sizes = [16, 32], strides = [1, 1]} : vector<16x192xf32> to vector<16x32xf32>
    %257 = arith.truncf %256 : vector<16x32xf32> to vector<16x32xbf16>
    %258 = vector.extract_strided_slice %254 {offsets = [0, 64], sizes = [16, 32], strides = [1, 1]} : vector<16x192xf32> to vector<16x32xf32>
    %259 = arith.truncf %258 : vector<16x32xf32> to vector<16x32xbf16>
    %260 = vector.extract_strided_slice %254 {offsets = [0, 128], sizes = [16, 32], strides = [1, 1]} : vector<16x192xf32> to vector<16x32xf32>
    %261 = arith.truncf %260 : vector<16x32xf32> to vector<16x32xbf16>
    %cst_96 = arith.constant dense<0.000000e+00> : vector<16x16xf32>
    %262 = tpu.matmul %257, %259, %cst_96 {dimension_numbers = #tpu.dot_dimension_numbers<[1], [1], [0], [0], [0, 0, 1, 0], [], []>} : vector<16x32xbf16>, vector<16x32xbf16>, vector<16x16xf32> -> vector<16x16xf32>
    %cst_97 = arith.constant 0.176776692 : f32
    %263 = vector.broadcast %cst_97 : f32 to vector<16x16xf32>
    %264 = arith.mulf %262, %263 : vector<16x16xf32>
    %265 = arith.addf %264, %18 : vector<16x16xf32>
    %cst_98 = arith.constant dense<0xFF800000> : vector<16xf32>
    %266 = vector.multi_reduction <maximumf>, %265, %cst_98 [1] : vector<16x16xf32> to vector<16xf32>
    %267 = vector.shape_cast %266 : vector<16xf32> to vector<16x1xf32>
    %268 = vector.broadcast %267 : vector<16x1xf32> to vector<16x16xf32>
    %269 = arith.subf %265, %268 : vector<16x16xf32>
    %270 = math.exp %269 : vector<16x16xf32>
    %cst_99 = arith.constant dense<0.000000e+00> : vector<16xf32>
    %271 = vector.multi_reduction <add>, %270, %cst_99 [1] : vector<16x16xf32> to vector<16xf32>
    %272 = vector.shape_cast %271 : vector<16xf32> to vector<16x1xf32>
    %273 = tpu.reciprocal %272 : vector<16x1xf32> -> vector<16x1xf32>
    %274 = vector.broadcast %273 : vector<16x1xf32> to vector<16x16xf32>
    %275 = arith.mulf %270, %274 : vector<16x16xf32>
    %276 = arith.truncf %275 : vector<16x16xf32> to vector<16x16xbf16>
    %cst_100 = arith.constant dense<0.000000e+00> : vector<16x32xf32>
    %277 = tpu.matmul %276, %261, %cst_100 {dimension_numbers = #tpu.dot_dimension_numbers<[1], [0], [0], [1], [0, 0, 1, 1], [], []>} : vector<16x16xbf16>, vector<16x32xbf16>, vector<16x32xf32> -> vector<16x32xf32>
    %278 = arith.truncf %277 : vector<16x32xf32> to vector<16x32xbf16>
    %279 = vector.extract_strided_slice %179 {offsets = [0, 0], sizes = [32, 64], strides = [1, 1]} : vector<64x64xbf16> to vector<32x64xbf16>
    %cst_101 = arith.constant dense<0.000000e+00> : vector<16x64xf32>
    %280 = tpu.matmul %278, %279, %cst_101 {dimension_numbers = #tpu.dot_dimension_numbers<[1], [0], [0], [1], [0, 0, 1, 1], [], []>} : vector<16x32xbf16>, vector<32x64xbf16>, vector<16x64xf32> -> vector<16x64xf32>
    %281 = arith.addf %255, %280 : vector<16x64xf32>
    %282 = vector.extract_strided_slice %254 {offsets = [0, 32], sizes = [16, 32], strides = [1, 1]} : vector<16x192xf32> to vector<16x32xf32>
    %283 = arith.truncf %282 : vector<16x32xf32> to vector<16x32xbf16>
    %284 = vector.extract_strided_slice %254 {offsets = [0, 96], sizes = [16, 32], strides = [1, 1]} : vector<16x192xf32> to vector<16x32xf32>
    %285 = arith.truncf %284 : vector<16x32xf32> to vector<16x32xbf16>
    %286 = vector.extract_strided_slice %254 {offsets = [0, 160], sizes = [16, 32], strides = [1, 1]} : vector<16x192xf32> to vector<16x32xf32>
    %287 = arith.truncf %286 : vector<16x32xf32> to vector<16x32xbf16>
    %cst_102 = arith.constant dense<0.000000e+00> : vector<16x16xf32>
    %288 = tpu.matmul %283, %285, %cst_102 {dimension_numbers = #tpu.dot_dimension_numbers<[1], [1], [0], [0], [0, 0, 1, 0], [], []>} : vector<16x32xbf16>, vector<16x32xbf16>, vector<16x16xf32> -> vector<16x16xf32>
    %cst_103 = arith.constant 0.176776692 : f32
    %289 = vector.broadcast %cst_103 : f32 to vector<16x16xf32>
    %290 = arith.mulf %288, %289 : vector<16x16xf32>
    %291 = arith.addf %290, %18 : vector<16x16xf32>
    %cst_104 = arith.constant dense<0xFF800000> : vector<16xf32>
    %292 = vector.multi_reduction <maximumf>, %291, %cst_104 [1] : vector<16x16xf32> to vector<16xf32>
    %293 = vector.shape_cast %292 : vector<16xf32> to vector<16x1xf32>
    %294 = vector.broadcast %293 : vector<16x1xf32> to vector<16x16xf32>
    %295 = arith.subf %291, %294 : vector<16x16xf32>
    %296 = math.exp %295 : vector<16x16xf32>
    %cst_105 = arith.constant dense<0.000000e+00> : vector<16xf32>
    %297 = vector.multi_reduction <add>, %296, %cst_105 [1] : vector<16x16xf32> to vector<16xf32>
    %298 = vector.shape_cast %297 : vector<16xf32> to vector<16x1xf32>
    %299 = tpu.reciprocal %298 : vector<16x1xf32> -> vector<16x1xf32>
    %300 = vector.broadcast %299 : vector<16x1xf32> to vector<16x16xf32>
    %301 = arith.mulf %296, %300 : vector<16x16xf32>
    %302 = arith.truncf %301 : vector<16x16xf32> to vector<16x16xbf16>
    %cst_106 = arith.constant dense<0.000000e+00> : vector<16x32xf32>
    %303 = tpu.matmul %302, %287, %cst_106 {dimension_numbers = #tpu.dot_dimension_numbers<[1], [0], [0], [1], [0, 0, 1, 1], [], []>} : vector<16x16xbf16>, vector<16x32xbf16>, vector<16x32xf32> -> vector<16x32xf32>
    %304 = arith.truncf %303 : vector<16x32xf32> to vector<16x32xbf16>
    %305 = vector.extract_strided_slice %179 {offsets = [32, 0], sizes = [32, 64], strides = [1, 1]} : vector<64x64xbf16> to vector<32x64xbf16>
    %cst_107 = arith.constant dense<0.000000e+00> : vector<16x64xf32>
    %306 = tpu.matmul %304, %305, %cst_107 {dimension_numbers = #tpu.dot_dimension_numbers<[1], [0], [0], [1], [0, 0, 1, 1], [], []>} : vector<16x32xbf16>, vector<32x64xbf16>, vector<16x64xf32> -> vector<16x64xf32>
    %307 = arith.addf %281, %306 : vector<16x64xf32>
    %308 = tpu.concatenate %253, %307 in 0 : vector<16x64xf32>, vector<16x64xf32> -> vector<32x64xf32>
    %309 = arith.addf %173, %308 : vector<32x64xf32>
    %310 = arith.mulf %309, %309 : vector<32x64xf32>
    %cst_108 = arith.constant dense<0.000000e+00> : vector<32xf32>
    %311 = vector.multi_reduction <add>, %310, %cst_108 [1] : vector<32x64xf32> to vector<32xf32>
    %312 = vector.shape_cast %311 : vector<32xf32> to vector<32x1xf32>
    %cst_109 = arith.constant 6.400000e+01 : f32
    %313 = vector.broadcast %cst_109 : f32 to vector<32x1xf32>
    %314 = arith.divf %312, %313 : vector<32x1xf32>
    %cst_110 = arith.constant 9.99999997E-7 : f32
    %315 = vector.broadcast %cst_110 : f32 to vector<32x1xf32>
    %316 = arith.addf %314, %315 : vector<32x1xf32>
    %317 = math.rsqrt %316 : vector<32x1xf32>
    %318 = vector.broadcast %317 : vector<32x1xf32> to vector<32x64xf32>
    %319 = arith.mulf %309, %318 : vector<32x64xf32>
    %320 = vector.broadcast %181 : vector<1x64xf32> to vector<32x64xf32>
    %321 = arith.mulf %319, %320 : vector<32x64xf32>
    %322 = arith.truncf %321 : vector<32x64xf32> to vector<32x64xbf16>
    %cst_111 = arith.constant dense<0.000000e+00> : vector<32x128xf32>
    %323 = tpu.matmul %322, %183, %cst_111 {dimension_numbers = #tpu.dot_dimension_numbers<[1], [0], [0], [1], [0, 0, 1, 1], [], []>} : vector<32x64xbf16>, vector<64x128xbf16>, vector<32x128xf32> -> vector<32x128xf32>
    %cst_112 = arith.constant 0.000000e+00 : f32
    %324 = vector.broadcast %cst_112 : f32 to vector<32x128xf32>
    %325 = arith.maximumf %323, %324 : vector<32x128xf32>
    %326 = arith.truncf %325 : vector<32x128xf32> to vector<32x128xbf16>
    %cst_113 = arith.constant dense<0.000000e+00> : vector<32x64xf32>
    %327 = tpu.matmul %326, %185, %cst_113 {dimension_numbers = #tpu.dot_dimension_numbers<[1], [0], [0], [1], [0, 0, 1, 1], [], []>} : vector<32x128xbf16>, vector<128x64xbf16>, vector<32x64xf32> -> vector<32x64xf32>
    %328 = arith.addf %309, %327 : vector<32x64xf32>
    %329 = vector.extract_strided_slice %328 {offsets = [0, 0], sizes = [1, 64], strides = [1, 1]} : vector<32x64xf32> to vector<1x64xf32>
    %330 = vector.extract_strided_slice %328 {offsets = [16, 0], sizes = [1, 64], strides = [1, 1]} : vector<32x64xf32> to vector<1x64xf32>
    %331 = tpu.concatenate %329, %330 in 0 : vector<1x64xf32>, vector<1x64xf32> -> vector<2x64xf32>
    %c0_114 = arith.constant 0 : index
    %c0_115 = arith.constant 0 : index
    %332 = vector.load %arg10[%c0_114, %c0_115] : memref<1x64xf32, #tpu.memory_space<vmem>>, vector<1x64xf32>
    %333 = arith.mulf %331, %331 : vector<2x64xf32>
    %cst_116 = arith.constant dense<0.000000e+00> : vector<2xf32>
    %334 = vector.multi_reduction <add>, %333, %cst_116 [1] : vector<2x64xf32> to vector<2xf32>
    %335 = vector.shape_cast %334 : vector<2xf32> to vector<2x1xf32>
    %cst_117 = arith.constant 6.400000e+01 : f32
    %336 = vector.broadcast %cst_117 : f32 to vector<2x1xf32>
    %337 = arith.divf %335, %336 : vector<2x1xf32>
    %cst_118 = arith.constant 9.99999997E-7 : f32
    %338 = vector.broadcast %cst_118 : f32 to vector<2x1xf32>
    %339 = arith.addf %337, %338 : vector<2x1xf32>
    %340 = math.rsqrt %339 : vector<2x1xf32>
    %341 = vector.broadcast %340 : vector<2x1xf32> to vector<2x64xf32>
    %342 = arith.mulf %331, %341 : vector<2x64xf32>
    %343 = vector.broadcast %332 : vector<1x64xf32> to vector<2x64xf32>
    %344 = arith.mulf %342, %343 : vector<2x64xf32>
    %345 = arith.truncf %344 : vector<2x64xf32> to vector<2x64xbf16>
    %c0_119 = arith.constant 0 : index
    %c0_120 = arith.constant 0 : index
    %346 = vector.load %arg11[%c0_119, %c0_120] : memref<64x256xbf16, #tpu.memory_space<vmem>>, vector<64x256xbf16>
    %cst_121 = arith.constant dense<0.000000e+00> : vector<2x256xf32>
    %347 = tpu.matmul %345, %346, %cst_121 {dimension_numbers = #tpu.dot_dimension_numbers<[1], [0], [0], [1], [0, 0, 1, 1], [], []>} : vector<2x64xbf16>, vector<64x256xbf16>, vector<2x256xf32> -> vector<2x256xf32>
    %348 = arith.mulf %347, %347 : vector<2x256xf32>
    %cst_122 = arith.constant dense<0.000000e+00> : vector<2xf32>
    %349 = vector.multi_reduction <add>, %348, %cst_122 [1] : vector<2x256xf32> to vector<2xf32>
    %350 = vector.shape_cast %349 : vector<2xf32> to vector<2x1xf32>
    %cst_123 = arith.constant 1.000000e-24 : f32
    %351 = vector.broadcast %cst_123 : f32 to vector<2x1xf32>
    %352 = arith.maximumf %350, %351 : vector<2x1xf32>
    %353 = math.rsqrt %352 : vector<2x1xf32>
    %354 = vector.broadcast %353 : vector<2x1xf32> to vector<2x256xf32>
    %355 = arith.mulf %347, %354 : vector<2x256xf32>
    %356 = arith.truncf %355 : vector<2x256xf32> to vector<2x256xbf16>
    %c0_124 = arith.constant 0 : index
    %c0_125 = arith.constant 0 : index
    %357 = vector.load %arg12[%c0_124, %c0_125] : memref<256x128xbf16, #tpu.memory_space<vmem>>, vector<256x128xbf16>
    %cst_126 = arith.constant dense<0.000000e+00> : vector<2x128xf32>
    %358 = tpu.matmul %356, %357, %cst_126 {dimension_numbers = #tpu.dot_dimension_numbers<[1], [0], [0], [1], [0, 0, 1, 1], [], []>} : vector<2x256xbf16>, vector<256x128xbf16>, vector<2x128xf32> -> vector<2x128xf32>
    %c0_127 = arith.constant 0 : index
    %c0_128 = arith.constant 0 : index
    %359 = vector.load %arg13[%c0_127, %c0_128] : memref<1x128xf32, #tpu.memory_space<vmem>>, vector<1x128xf32>
    %360 = vector.broadcast %359 : vector<1x128xf32> to vector<2x128xf32>
    %361 = arith.addf %358, %360 : vector<2x128xf32>
    %c0_129 = arith.constant 0 : index
    %c0_130 = arith.constant 0 : index
    %362 = vector.load %arg14[%c0_129, %c0_130] : memref<2x128xf32, #tpu.memory_space<vmem>>, vector<2x128xf32>
    tpu.vector_store %arg14[%c0_129, %c0_130], %361 {strides = array<i32>} : memref<2x128xf32, #tpu.memory_space<vmem>>, vector<2x128xf32>,
    return
  }
  func.func @transform_0(%arg0: i32) -> (i32, i32) {
    %c0_i32 = arith.constant 0 : i32
    %c0_i32_0 = arith.constant 0 : i32
    %c0_i32_1 = arith.constant 0 : i32
    return %c0_i32, %c0_i32_0 : i32, i32
  }
  func.func @transform_1(%arg0: i32) -> (i32, i32) {
    %c0_i32 = arith.constant 0 : i32
    %c0_i32_0 = arith.constant 0 : i32
    %c0_i32_1 = arith.constant 0 : i32
    return %c0_i32, %c0_i32_0 : i32, i32
  }
  func.func @transform_2(%arg0: i32) -> (i32, i32) {
    %c0_i32 = arith.constant 0 : i32
    %c0_i32_0 = arith.constant 0 : i32
    %c0_i32_1 = arith.constant 0 : i32
    return %c0_i32, %c0_i32_0 : i32, i32
  }
  func.func @transform_3(%arg0: i32) -> (i32, i32, i32) {
    %c0_i32 = arith.constant 0 : i32
    %c0_i32_0 = arith.constant 0 : i32
    %c0_i32_1 = arith.constant 0 : i32
    %c0_i32_2 = arith.constant 0 : i32
    return %c0_i32, %c0_i32_0, %c0_i32_1 : i32, i32, i32
  }
  func.func @transform_4(%arg0: i32) -> (i32, i32, i32) {
    %c0_i32 = arith.constant 0 : i32
    %c0_i32_0 = arith.constant 0 : i32
    %c0_i32_1 = arith.constant 0 : i32
    %c0_i32_2 = arith.constant 0 : i32
    return %c0_i32, %c0_i32_0, %c0_i32_1 : i32, i32, i32
  }
  func.func @transform_5(%arg0: i32) -> (i32, i32, i32) {
    %c0_i32 = arith.constant 0 : i32
    %c0_i32_0 = arith.constant 0 : i32
    %c0_i32_1 = arith.constant 0 : i32
    %c0_i32_2 = arith.constant 0 : i32
    return %c0_i32, %c0_i32_0, %c0_i32_1 : i32, i32, i32
  }
  func.func @transform_6(%arg0: i32) -> (i32, i32, i32) {
    %c0_i32 = arith.constant 0 : i32
    %c0_i32_0 = arith.constant 0 : i32
    %c0_i32_1 = arith.constant 0 : i32
    %c0_i32_2 = arith.constant 0 : i32
    return %c0_i32, %c0_i32_0, %c0_i32_1 : i32, i32, i32
  }
  func.func @transform_7(%arg0: i32) -> (i32, i32, i32) {
    %c0_i32 = arith.constant 0 : i32
    %c0_i32_0 = arith.constant 0 : i32
    %c0_i32_1 = arith.constant 0 : i32
    %c0_i32_2 = arith.constant 0 : i32
    return %c0_i32, %c0_i32_0, %c0_i32_1 : i32, i32, i32
  }
  func.func @transform_8(%arg0: i32) -> (i32, i32, i32) {
    %c0_i32 = arith.constant 0 : i32
    %c0_i32_0 = arith.constant 0 : i32
    %c0_i32_1 = arith.constant 0 : i32
    %c0_i32_2 = arith.constant 0 : i32
    return %c0_i32, %c0_i32_0, %c0_i32_1 : i32, i32, i32
  }
  func.func @transform_9(%arg0: i32) -> (i32, i32) {
    %c0_i32 = arith.constant 0 : i32
    %c0_i32_0 = arith.constant 0 : i32
    %c0_i32_1 = arith.constant 0 : i32
    return %c0_i32, %c0_i32_0 : i32, i32
  }
  func.func @transform_10(%arg0: i32) -> (i32, i32) {
    %c0_i32 = arith.constant 0 : i32
    %c0_i32_0 = arith.constant 0 : i32
    %c0_i32_1 = arith.constant 0 : i32
    return %c0_i32, %c0_i32_0 : i32, i32
  }
  func.func @transform_11(%arg0: i32) -> (i32, i32) {
    %c0_i32 = arith.constant 0 : i32
    %c0_i32_0 = arith.constant 0 : i32
    %c0_i32_1 = arith.constant 0 : i32
    return %c0_i32, %c0_i32_0 : i32, i32
  }
  func.func @transform_12(%arg0: i32) -> (i32, i32) {
    %c0_i32 = arith.constant 0 : i32
    %c0_i32_0 = arith.constant 0 : i32
    %c0_i32_1 = arith.constant 0 : i32
    return %c0_i32, %c0_i32_0 : i32, i32
  }
  func.func @transform_13(%arg0: i32) -> (i32, i32) {
    %c0_i32 = arith.constant 0 : i32
    %c0_i32_0 = arith.constant 0 : i32
    %c0_i32_1 = arith.constant 0 : i32
    return %c0_i32, %c0_i32_0 : i32, i32
  }
}

</mosaic_0001>

<llo_original>
// kernel: codet5p_forward.1
$region0: #{codet5p_forward.1}
  #allocation0 [shape = 'u32[]', space=smem, size = 0x4, offset = 0x4, fixed_abs, tag = 'smem constant byte address 0x4 - core index']
  #allocation1 [shape = 'u32[72,128]{1,0:T(1,128)}', space=vmem, size = 0x9000, scoped, tag = 'internal scratch']
  %s0 = inlined_call_operand.vmem [shape: s32[32,1], index: 0, kind: input, shape index: {}]
  %s1 = inlined_call_operand.vmem [shape: f32[2,16], index: 1, kind: input, shape index: {}]
  %s2 = inlined_call_operand.vmem [shape: f32[256,64], index: 2, kind: input, shape index: {}]
  %s3 = inlined_call_operand.vmem [shape: f32[2,1,64], index: 3, kind: input, shape index: {}]
  %s4 = inlined_call_operand.vmem [shape: bf16[2,64,192], index: 4, kind: input, shape index: {}]
  %s5 = inlined_call_operand.vmem [shape: bf16[2,64,64], index: 5, kind: input, shape index: {}]
  %s6 = inlined_call_operand.vmem [shape: f32[2,1,64], index: 6, kind: input, shape index: {}]
  %s7 = inlined_call_operand.vmem [shape: bf16[2,64,128], index: 7, kind: input, shape index: {}]
  %s8 = inlined_call_operand.vmem [shape: bf16[2,128,64], index: 8, kind: input, shape index: {}]
  %s9 = inlined_call_operand.vmem [shape: f32[1,64], index: 9, kind: input, shape index: {}]
  %s10 = inlined_call_operand.vmem [shape: bf16[64,256], index: 10, kind: input, shape index: {}]
  %s11 = inlined_call_operand.vmem [shape: bf16[256,128], index: 11, kind: input, shape index: {}]
  %s12 = inlined_call_operand.vmem [shape: f32[1,128], index: 12, kind: input, shape index: {}]
  %s13 = inlined_call_operand.hbm [shape: f32[2,128], index: 13, kind: output, shape index: {}]
  %s14 = sld [smem:[#allocation0]]
  $region62: #{codet5p_forward.1} parent=0
    _
  %s16 = ssub.s32 1, %s14
  %s17 = scalar_select 0, %s16, %s14
  $region1: #{codet5p_forward.1} parent=0
    #allocation2 [shape = 'u8[1024]{0}', space=vmem, size = 0x400, scoped, tag = 'output window, operand 0, single buffered']
    #allocation3 [shape = 's32[1]{0}', space=sflag, size = 0x4, scoped, tag = 'scoped memory for codet5p_forward.1']
    %18 = vsyncpa [#allocation3], 0
    // Predicated region
    $region2: #{codet5p_forward.1} parent=1 // pred_check
      _
    $region3: #{codet5p_forward.1} parent=1 // pred_check_branch
      %20 = sbr.rel (0) target = $region5
    $region4: #{codet5p_forward.1} parent=1 // pred_region
      _
    $region5: #{codet5p_forward.1} parent=1 // pred_fallthru
      _
    // Predicated region
    $region6: #{codet5p_forward.1} parent=1 // pred_check
      _
    $region7: #{codet5p_forward.1} parent=1 // pred_check_branch
      %22 = sbr.rel (0) target = $region9
    $region8: #{codet5p_forward.1} parent=1 // pred_region
      _
    $region9: #{codet5p_forward.1} parent=1 // pred_fallthru
      _
    // Predicated region
    $region10: #{codet5p_forward.1} parent=1 // pred_check
      _
    $region11: #{codet5p_forward.1} parent=1 // pred_check_branch
      %24 = sbr.rel (0) target = $region13
    $region12: #{codet5p_forward.1} parent=1 // pred_region
      _
    $region13: #{codet5p_forward.1} parent=1 // pred_fallthru
      _
    // Predicated region
    $region14: #{codet5p_forward.1} parent=1 // pred_check
      _
    $region15: #{codet5p_forward.1} parent=1 // pred_check_branch
      %26 = sbr.rel (0) target = $region17
    $region16: #{codet5p_forward.1} parent=1 // pred_region
      _
    $region17: #{codet5p_forward.1} parent=1 // pred_fallthru
      _
    // Predicated region
    $region18: #{codet5p_forward.1} parent=1 // pred_check
      _
    $region19: #{codet5p_forward.1} parent=1 // pred_check_branch
      %28 = sbr.rel (0) target = $region21
    $region20: #{codet5p_forward.1} parent=1 // pred_region
      _
    $region21: #{codet5p_forward.1} parent=1 // pred_fallthru
      _
    // Predicated region
    $region22: #{codet5p_forward.1} parent=1 // pred_check
      _
    $region23: #{codet5p_forward.1} parent=1 // pred_check_branch
      %30 = sbr.rel (0) target = $region25
    $region24: #{codet5p_forward.1} parent=1 // pred_region
      _
    $region25: #{codet5p_forward.1} parent=1 // pred_fallthru
      _
    // Predicated region
    $region26: #{codet5p_forward.1} parent=1 // pred_check
      _
    $region27: #{codet5p_forward.1} parent=1 // pred_check_branch
      %32 = sbr.rel (0) target = $region29
    $region28: #{codet5p_forward.1} parent=1 // pred_region
      _
    $region29: #{codet5p_forward.1} parent=1 // pred_fallthru
      _
    // Predicated region
    $region30: #{codet5p_forward.1} parent=1 // pred_check
      _
    $region31: #{codet5p_forward.1} parent=1 // pred_check_branch
      %34 = sbr.rel (0) target = $region33
    $region32: #{codet5p_forward.1} parent=1 // pred_region
      _
    $region33: #{codet5p_forward.1} parent=1 // pred_fallthru
      _
    // Predicated region
    $region34: #{codet5p_forward.1} parent=1 // pred_check
      _
    $region35: #{codet5p_forward.1} parent=1 // pred_check_branch
      %36 = sbr.rel (0) target = $region37
    $region36: #{codet5p_forward.1} parent=1 // pred_region
      _
    $region37: #{codet5p_forward.1} parent=1 // pred_fallthru
      _
    // Predicated region
    $region38: #{codet5p_forward.1} parent=1 // pred_check
      _
    $region39: #{codet5p_forward.1} parent=1 // pred_check_branch
      %38 = sbr.rel (0) target = $region41
    $region40: #{codet5p_forward.1} parent=1 // pred_region
      _
    $region41: #{codet5p_forward.1} parent=1 // pred_fallthru
      _
    // Predicated region
    $region42: #{codet5p_forward.1} parent=1 // pred_check
      _
    $region43: #{codet5p_forward.1} parent=1 // pred_check_branch
      %40 = sbr.rel (0) target = $region45
    $region44: #{codet5p_forward.1} parent=1 // pred_region
      _
    $region45: #{codet5p_forward.1} parent=1 // pred_fallthru
      _
    // Predicated region
    $region46: #{codet5p_forward.1} parent=1 // pred_check
      _
    $region47: #{codet5p_forward.1} parent=1 // pred_check_branch
      %42 = sbr.rel (0) target = $region49
    $region48: #{codet5p_forward.1} parent=1 // pred_region
      _
    $region49: #{codet5p_forward.1} parent=1 // pred_fallthru
      _
    // Predicated region
    $region50: #{codet5p_forward.1} parent=1 // pred_check
      _
    $region51: #{codet5p_forward.1} parent=1 // pred_check_branch
      %44 = sbr.rel (0) target = $region53
    $region52: #{codet5p_forward.1} parent=1 // pred_region
      _
    $region53: #{codet5p_forward.1} parent=1 // pred_fallthru
      _
    %v46 = vld [vmem:[%s0] sm:$0xff]
    %v47 = vld [vmem:[%s0 + $0x8] sm:$0xff]
    %v48 = vld [vmem:[%s0 + $0x10] sm:$0xff]
    %v49 = vld [vmem:[%s0 + $0x18] sm:$0xff]
    %v50 = vlaneseq
    %v51 = vand.u32 %v50, 127
    %v52 = vadd.s32 %v51, 128
    %53 = vset.pattern.permute.xlu0 0
    %54 = vperm.xlu0 %53, %v46
    %v55 = vpop.permute.xlu0 %54
    %56 = vset.pattern.permute.xlu0 0
    %57 = vperm.xlu0 %56, %v47
    %v58 = vpop.permute.xlu0 %57
    %59 = vset.pattern.permute.xlu0 0
    %60 = vperm.xlu0 %59, %v48
    %v61 = vpop.permute.xlu0 %60
    %62 = vset.pattern.permute.xlu0 0
    %63 = vperm.xlu0 %62, %v49
    %v64 = vpop.permute.xlu0 %63
    %vm65 = vcmp.eq.s32.totalorder %v51, %v55
    %vm66 = vcmp.eq.s32.totalorder %v52, %v55
    %vm67 = vcmp.eq.s32.totalorder %v51, %v58
    %vm68 = vcmp.eq.s32.totalorder %v52, %v58
    %vm69 = vcmp.eq.s32.totalorder %v51, %v61
    %vm70 = vcmp.eq.s32.totalorder %v52, %v61
    %vm71 = vcmp.eq.s32.totalorder %v51, %v64
    %vm72 = vcmp.eq.s32.totalorder %v52, %v64
    %v73 = vsel %vm65, 1, 0
    %v74 = vsel %vm66, 1, 0
    %v75 = vsel %vm67, 1, 0
    %v76 = vsel %vm68, 1, 0
    %v77 = vsel %vm69, 1, 0
    %v78 = vsel %vm70, 1, 0
    %v79 = vsel %vm71, 1, 0
    %v80 = vsel %vm72, 1, 0
    %v81 = vcvt.s32.f32 %v73
    %v82 = vcvt.s32.f32 %v74
    %v83 = vcvt.s32.f32 %v75
    %v84 = vcvt.s32.f32 %v76
    %v85 = vcvt.s32.f32 %v77
    %v86 = vcvt.s32.f32 %v78
    %v87 = vcvt.s32.f32 %v79
    %v88 = vcvt.s32.f32 %v80
    %v89 = vld [vmem:[%s2] sm:$0xff]
    %v90 = vld [vmem:[%s2 + $0x8] sm:$0xff]
    %v91 = vld [vmem:[%s2 + $0x10] sm:$0xff]
    %v92 = vld [vmem:[%s2 + $0x18] sm:$0xff]
    %v93 = vld [vmem:[%s2 + $0x20] sm:$0xff]
    %v94 = vld [vmem:[%s2 + $0x28] sm:$0xff]
    %v95 = vld [vmem:[%s2 + $0x30] sm:$0xff]
    %v96 = vld [vmem:[%s2 + $0x38] sm:$0xff]
    %v97 = vld [vmem:[%s2 + $0x40] sm:$0xff]
    %v98 = vld [vmem:[%s2 + $0x48] sm:$0xff]
    %v99 = vld [vmem:[%s2 + $0x50] sm:$0xff]
    %v100 = vld [vmem:[%s2 + $0x58] sm:$0xff]
    %v101 = vld [vmem:[%s2 + $0x60] sm:$0xff]
    %v102 = vld [vmem:[%s2 + $0x68] sm:$0xff]
    %v103 = vld [vmem:[%s2 + $0x70] sm:$0xff]
    %v104 = vld [vmem:[%s2 + $0x78] sm:$0xff]
    %v105 = vld [vmem:[%s2 + $0x80] sm:$0xff]
    %v106 = vld [vmem:[%s2 + $0x88] sm:$0xff]
    %v107 = vld [vmem:[%s2 + $0x90] sm:$0xff]
    %v108 = vld [vmem:[%s2 + $0x98] sm:$0xff]
    %v109 = vld [vmem:[%s2 + $0xa0] sm:$0xff]
    %v110 = vld [vmem:[%s2 + $0xa8] sm:$0xff]
    %v111 = vld [vmem:[%s2 + $0xb0] sm:$0xff]
    %v112 = vld [vmem:[%s2 + $0xb8] sm:$0xff]
    %v113 = vld [vmem:[%s2 + $0xc0] sm:$0xff]
    %v114 = vld [vmem:[%s2 + $0xc8] sm:$0xff]
    %v115 = vld [vmem:[%s2 + $0xd0] sm:$0xff]
    %v116 = vld [vmem:[%s2 + $0xd8] sm:$0xff]
    %v117 = vld [vmem:[%s2 + $0xe0] sm:$0xff]
    %v118 = vld [vmem:[%s2 + $0xe8] sm:$0xff]
    %v119 = vld [vmem:[%s2 + $0xf0] sm:$0xff]
    %v120 = vld [vmem:[%s2 + $0xf8] sm:$0xff]
    %121 = vmatpush.msra.mxu0 %v104
    %122 = vmatpush.msra.mxu0 %v103
    %123 = vmatpush.msra.mxu0 %v102
    %124 = vmatpush.msra.mxu0 %v101
    %125 = vmatpush.msra.mxu0 %v100
    %126 = vmatpush.msra.mxu0 %v99
    %127 = vmatpush.msra.mxu0 %v98
    %128 = vmatpush.msra.mxu0 %v97
    %129 = vmatpush.msra.mxu0 %v96
    %130 = vmatpush.msra.mxu0 %v95
    %131 = vmatpush.msra.mxu0 %v94
    %132 = vmatpush.msra.mxu0 %v93
    %133 = vmatpush.msra.mxu0 %v92
    %134 = vmatpush.msra.mxu0 %v91
    %135 = vmatpush.msra.mxu0 %v90
    %136 = vmatpush.msra.mxu0 %v89
    %137 = vmatmul.f32.gmra.mxu0 %v81
    %v138 = vpop.f32.mrf.mxu0
    %v139 = vadd.f32 0.0, %v138
    %140 = vmatmul.f32.gmra.mxu0 %v83
    %v141 = vpop.f32.mrf.mxu0
    %v142 = vadd.f32 0.0, %v141
    %143 = vmatmul.f32.gmra.mxu0 %v85
    %v144 = vpop.f32.mrf.mxu0
    %v145 = vadd.f32 0.0, %v144
    %146 = vmatmul.f32.gmra.mxu0 %v87
    %v147 = vpop.f32.mrf.mxu0
    %v148 = vadd.f32 0.0, %v147
    %149 = vdwg.mxu0
    %150 = vmatpush.msra.mxu0 %v120
    %151 = vmatpush.msra.mxu0 %v119
    %152 = vmatpush.msra.mxu0 %v118
    %153 = vmatpush.msra.mxu0 %v117
    %154 = vmatpush.msra.mxu0 %v116
    %155 = vmatpush.msra.mxu0 %v115
    %156 = vmatpush.msra.mxu0 %v114
    %157 = vmatpush.msra.mxu0 %v113
    %158 = vmatpush.msra.mxu0 %v112
    %159 = vmatpush.msra.mxu0 %v111
    %160 = vmatpush.msra.mxu0 %v110
    %161 = vmatpush.msra.mxu0 %v109
    %162 = vmatpush.msra.mxu0 %v108
    %163 = vmatpush.msra.mxu0 %v107
    %164 = vmatpush.msra.mxu0 %v106
    %165 = vmatpush.msra.mxu0 %v105
    %166 = vmatmul.f32.gmra.mxu0 %v82
    %v167 = vpop.f32.mrf.mxu0
    %v168 = vadd.f32 %v139, %v167
    %169 = vmatmul.f32.gmra.mxu0 %v84
    %v170 = vpop.f32.mrf.mxu0
    %v171 = vadd.f32 %v142, %v170
    %172 = vmatmul.f32.gmra.mxu0 %v86
    %v173 = vpop.f32.mrf.mxu0
    %v174 = vadd.f32 %v145, %v173
    %175 = vmatmul.f32.gmra.mxu0 %v88
    %v176 = vpop.f32.mrf.mxu0
    %v177 = vadd.f32 %v148, %v176
    %178 = vdwg.mxu0
    %v179 = vld [vmem:[%s1] sm:$0x3]
    %v180 = vsub.f32 1.0, %v179
    %v181 = vmul.f32 %v180, -1e+09
    %v182 = vperm.slane %v181, 0
    %v183 = vperm.slane %v181, 1
    %v184 = vld [vmem:[%s3] sm:$0x1]
    %v185 = vld [vmem:[%s4] sm:$0xff]
    %v186 = vld [vmem:[%s4 + $0x8] sm:$0xff]
    %v187 = vld [vmem:[%s4 + $0x10] sm:$0xff]
    %v188 = vld [vmem:[%s4 + $0x18] sm:$0xff]
    %v189 = vld [vmem:[%s4 + $0x20] sm:$0xff]
    %v190 = vld [vmem:[%s4 + $0x28] sm:$0xff]
    %v191 = vld [vmem:[%s4 + $0x30] sm:$0xff]
    %v192 = vld [vmem:[%s4 + $0x38] sm:$0xff]
    %v193 = vld [vmem:[%s5] sm:$0xf]
    %v194 = vld [vmem:[%s5 + $0x4] sm:$0xf]
    %v195 = vld [vmem:[%s5 + $0x8] sm:$0xf]
    %v196 = vld [vmem:[%s5 + $0xc] sm:$0xf]
    %v197 = vld [vmem:[%s5 + $0x10] sm:$0xf]
    %v198 = vld [vmem:[%s5 + $0x14] sm:$0xf]
    %v199 = vld [vmem:[%s5 + $0x18] sm:$0xf]
    %v200 = vld [vmem:[%s5 + $0x1c] sm:$0xf]
    %v201 = vld [vmem:[%s6] sm:$0x1]
    %v202 = vld [vmem:[%s7] sm:$0xf]
    %v203 = vld [vmem:[%s7 + $0x4] sm:$0xf]
    %v204 = vld [vmem:[%s7 + $0x8] sm:$0xf]
    %v205 = vld [vmem:[%s7 + $0xc] sm:$0xf]
    %v206 = vld [vmem:[%s7 + $0x10] sm:$0xf]
    %v207 = vld [vmem:[%s7 + $0x14] sm:$0xf]
    %v208 = vld [vmem:[%s7 + $0x18] sm:$0xf]
    %v209 = vld [vmem:[%s7 + $0x1c] sm:$0xf]
    %v210 = vld [vmem:[%s8] sm:$0xf]
    %v211 = vld [vmem:[%s8 + $0x4] sm:$0xf]
    %v212 = vld [vmem:[%s8 + $0x8] sm:$0xf]
    %v213 = vld [vmem:[%s8 + $0xc] sm:$0xf]
    %v214 = vld [vmem:[%s8 + $0x10] sm:$0xf]
    %v215 = vld [vmem:[%s8 + $0x14] sm:$0xf]
    %v216 = vld [vmem:[%s8 + $0x18] sm:$0xf]
    %v217 = vld [vmem:[%s8 + $0x1c] sm:$0xf]
    %v218 = vld [vmem:[%s8 + $0x20] sm:$0xf]
    %v219 = vld [vmem:[%s8 + $0x24] sm:$0xf]
    %v220 = vld [vmem:[%s8 + $0x28] sm:$0xf]
    %v221 = vld [vmem:[%s8 + $0x2c] sm:$0xf]
    %v222 = vld [vmem:[%s8 + $0x30] sm:$0xf]
    %v223 = vld [vmem:[%s8 + $0x34] sm:$0xf]
    %v224 = vld [vmem:[%s8 + $0x38] sm:$0xf]
    %v225 = vld [vmem:[%s8 + $0x3c] sm:$0xf]
    %v226 = vmul.f32 %v168, %v168
    %v227 = vmul.f32 %v171, %v171
    %v228 = vmul.f32 %v174, %v174
    %v229 = vmul.f32 %v177, %v177
    %vm230 = vcmask 523264
    %v231 = vsel %vm230, %v226, 0.0
    %232 = vadd.xlane.f32.xlu0 %v231
    %v233 = vpop.xlane.xlu0 %232
    %v234 = vsel %vm230, %v227, 0.0
    %235 = vadd.xlane.f32.xlu0 %v234
    %v236 = vpop.xlane.xlu0 %235
    %v237 = vsel %vm230, %v228, 0.0
    %238 = vadd.xlane.f32.xlu0 %v237
    %v239 = vpop.xlane.xlu0 %238
    %v240 = vsel %vm230, %v229, 0.0
    %241 = vadd.xlane.f32.xlu0 %v240
    %v242 = vpop.xlane.xlu0 %241
    %v243 = vrcp.pop 64.0
    %v244 = vmul.f32 64.0, %v243
    %v245 = vsub.f32 1.0, %v244
    %v246 = vmul.f32 %v243, %v245
    %v247 = vadd.f32 %v243, %v246
    %vm248 = vweird.f32 %v243
    %v249 = vsel %vm248, %v243, %v247
    %v250 = vmul.f32 %v233, %v249
    %v251 = vmul.f32 %v236, %v249
    %v252 = vmul.f32 %v239, %v249
    %v253 = vmul.f32 %v242, %v249
    %v254 = vadd.f32 %v250, 1e-06
    %v255 = vadd.f32 %v251, 1e-06
    %v256 = vadd.f32 %v252, 1e-06
    %v257 = vadd.f32 %v253, 1e-06
    %v258 = vrsqrt.pop %v254
    %v259 = vmul.f32 %v258, %v254
    %v260 = vmul.f32 %v259, %v258
    %v261 = vmul.f32 0.5, %v260
    %v262 = vsub.f32 1.5, %v261
    %v263 = vmul.f32 %v258, %v262
    %vm264 = vweird.f32 %v254
    %vm265 = vweird.f32 %v258
    %vm266 = vmor %vm264, %vm265
    %v267 = vsel %vm266, %v258, %v263
    %v268 = vrsqrt.pop %v255
    %v269 = vmul.f32 %v268, %v255
    %v270 = vmul.f32 %v269, %v268
    %v271 = vmul.f32 0.5, %v270
    %v272 = vsub.f32 1.5, %v271
    %v273 = vmul.f32 %v268, %v272
    %vm274 = vweird.f32 %v255
    %vm275 = vweird.f32 %v268
    %vm276 = vmor %vm274, %vm275
    %v277 = vsel %vm276, %v268, %v273
    %v278 = vrsqrt.pop %v256
    %v279 = vmul.f32 %v278, %v256
    %v280 = vmul.f32 %v279, %v278
    %v281 = vmul.f32 0.5, %v280
    %v282 = vsub.f32 1.5, %v281
    %v283 = vmul.f32 %v278, %v282
    %vm284 = vweird.f32 %v256
    %vm285 = vweird.f32 %v278
    %vm286 = vmor %vm284, %vm285
    %v287 = vsel %vm286, %v278, %v283
    %v288 = vrsqrt.pop %v257
    %v289 = vmul.f32 %v288, %v257
    %v290 = vmul.f32 %v289, %v288
    %v291 = vmul.f32 0.5, %v290
    %v292 = vsub.f32 1.5, %v291
    %v293 = vmul.f32 %v288, %v292
    %vm294 = vweird.f32 %v257
    %vm295 = vweird.f32 %v288
    %vm296 = vmor %vm294, %vm295
    %v297 = vsel %vm296, %v288, %v293
    %v298 = vmul.f32 %v168, %v267
    %v299 = vmul.f32 %v171, %v277
    %v300 = vmul.f32 %v174, %v287
    %v301 = vmul.f32 %v177, %v297
    %v303 = vperm.slane %v184, 0
    %v305 = vmul.f32 %v298, %v303
    %v306 = vmul.f32 %v299, %v303
    %v307 = vmul.f32 %v300, %v303
    %v308 = vmul.f32 %v301, %v303
    %v309 = vpack.c.bf16 %v306, %v305
    %v310 = vpack.c.bf16 %v308, %v307
    %v319 = vunpack.c.l.b16 %v185
    %v320 = vunpack.c.h.b16 %v185
    %v321 = vunpack.c.l.b16 %v186
    %v322 = vunpack.c.h.b16 %v186
    %v323 = vunpack.c.l.b16 %v187
    %v324 = vunpack.c.h.b16 %v187
    %v325 = vunpack.c.l.b16 %v188
    %v326 = vunpack.c.h.b16 %v188
    %v327 = vunpack.c.l.b16 %v189
    %v328 = vunpack.c.h.b16 %v189
    %v329 = vunpack.c.l.b16 %v190
    %v330 = vunpack.c.h.b16 %v190
    %v331 = vunpack.c.l.b16 %v191
    %v332 = vunpack.c.h.b16 %v191
    %v333 = vunpack.c.l.b16 %v192
    %v334 = vunpack.c.h.b16 %v192
    %v335 = vpack.c.b16 %v321, %v319
    %v336 = vpack.c.b16 %v322, %v320
    %v337 = vpack.c.b16 %v325, %v323
    %v338 = vpack.c.b16 %v326, %v324
    %v339 = vpack.c.b16 %v329, %v327
    %v340 = vpack.c.b16 %v330, %v328
    %v341 = vpack.c.b16 %v333, %v331
    %v342 = vpack.c.b16 %v334, %v332
    %v352 = vsel %vm230, %v309, 0
    %v355 = vsel %vm230, %v310, 0
    %357 = vmatpush.bf16.msra.mxu0 0
    %358 = vmatpush.bf16.msra.mxu0 0
    %359 = vmatpush.bf16.msra.mxu0 0
    %360 = vmatpush.bf16.msra.mxu0 0
    %361 = vmatpush.bf16.msra.mxu0 %v341
    %362 = vmatpush.bf16.msra.mxu0 %v339
    %363 = vmatpush.bf16.msra.mxu0 %v337
    %364 = vmatpush.bf16.msra.mxu0 %v335
    %365 = vmatmul.bf16.gmra.mxu0 %v352
    %v366 = vpop.f32.mrf.mxu0
    %v367 = vadd.f32 0.0, %v366
    %v368 = vpop.f32.mrf.mxu0
    %v369 = vadd.f32 0.0, %v368
    %370 = vmatmul.bf16.gmra.mxu0 %v355
    %v371 = vpop.f32.mrf.mxu0
    %v372 = vadd.f32 0.0, %v371
    %v373 = vpop.f32.mrf.mxu0
    %v374 = vadd.f32 0.0, %v373
    %375 = vdwg.mxu0
    %376 = vmatpush.bf16.msra.mxu0 0
    %377 = vmatpush.bf16.msra.mxu0 0
    %378 = vmatpush.bf16.msra.mxu0 0
    %379 = vmatpush.bf16.msra.mxu0 0
    %380 = vmatpush.bf16.msra.mxu0 %v342
    %381 = vmatpush.bf16.msra.mxu0 %v340
    %382 = vmatpush.bf16.msra.mxu0 %v338
    %383 = vmatpush.bf16.msra.mxu0 %v336
    %384 = vmatmul.bf16.gmra.mxu0 %v352
    %v385 = vpop.f32.mrf.mxu0
    %v386 = vadd.f32 0.0, %v385
    %v387 = vpop.f32.mrf.mxu0
    %v388 = vadd.f32 0.0, %v387
    %389 = vmatmul.bf16.gmra.mxu0 %v355
    %v390 = vpop.f32.mrf.mxu0
    %v391 = vadd.f32 0.0, %v390
    %v392 = vpop.f32.mrf.mxu0
    %v393 = vadd.f32 0.0, %v392
    %394 = vdwg.mxu0
    %v395 = vpack.c.bf16 %v369, %v367
    %v396 = vpack.c.bf16 %v388, %v386
    %398 = vrot.lane.b32.xlu0 %v395, 64
    %v399 = vpop.permute.xlu0 %398
    %vm400 = vcmask 261120
    %v402 = vsel %vm400, %v395, 0
    %v405 = vsel %vm400, %v399, 0
    %407 = vmatpush.bf16.xpose.msra.mxu0 0
    %408 = vmatpush.bf16.xpose.msra.mxu0 0
    %409 = vmatpush.bf16.xpose.msra.mxu0 0
    %410 = vmatpush.bf16.xpose.msra.mxu0 0
    %411 = vmatpush.bf16.xpose.msra.mxu0 0
    %412 = vmatpush.bf16.xpose.msra.mxu0 0
    %413 = vmatpush.bf16.xpose.msra.mxu0 0
    %414 = vmatpush.bf16.xpose.msra.mxu0 %v405
    %415 = vmatmul.bf16.gmra.mxu0 %v402
    %v416 = vpop.f32.mrf.mxu0
    %v417 = vadd.f32 0.0, %v416
    %v418 = vpop.f32.mrf.mxu0
    %v419 = vadd.f32 0.0, %v418
    %420 = vdwg.mxu0
    %v421 = vmul.f32 %v417, 0.17677669
    %v422 = vmul.f32 %v419, 0.17677669
    %v423 = vadd.f32 %v421, %v182
    %v424 = vadd.f32 %v422, %v182
    %vm425 = vcmask 130048
    %v426 = vsel %vm425, %v423, -inf
    %427 = vmax.xlane.f32.xlu0 %v426
    %v428 = vpop.xlane.xlu0 %427
    %v429 = vsel %vm425, %v424, -inf
    %430 = vmax.xlane.f32.xlu0 %v429
    %v431 = vpop.xlane.xlu0 %430
    %v432 = vsub.f32 %v423, %v428
    %v433 = vsub.f32 %v424, %v431
    %v434 = vmul.f32 %v432, 1.442695
    %v435 = vpow.pop %v434
    %v436 = vmul.f32 %v433, 1.442695
    %v437 = vpow.pop %v436
    %v438 = vsel %vm425, %v435, 0.0
    %439 = vadd.xlane.f32.xlu0 %v438
    %v440 = vpop.xlane.xlu0 %439
    %v441 = vsel %vm425, %v437, 0.0
    %442 = vadd.xlane.f32.xlu0 %v441
    %v443 = vpop.xlane.xlu0 %442
    %v444 = vrcp.pop %v440
    %v445 = vmul.f32 %v440, %v444
    %v446 = vsub.f32 1.0, %v445
    %v447 = vmul.f32 %v444, %v446
    %v448 = vadd.f32 %v444, %v447
    %vm449 = vweird.f32 %v440
    %vm450 = vweird.f32 %v444
    %vm451 = vmor %vm449, %vm450
    %v452 = vsel %vm451, %v444, %v448
    %v453 = vand.u32 2147483647, %v440
    %vm454 = vcmp.eq.f32.partialorder %v453, 8.507059e+37
    %v455 = vand.u32 %v440, 2147483648
    %v456 = vor.u32 1.1754944e-38, %v455
    %v457 = vsel %vm454, %v456, %v452
    %v458 = vrcp.pop %v443
    %v459 = vmul.f32 %v443, %v458
    %v460 = vsub.f32 1.0, %v459
    %v461 = vmul.f32 %v458, %v460
    %v462 = vadd.f32 %v458, %v461
    %vm463 = vweird.f32 %v443
    %vm464 = vweird.f32 %v458
    %vm465 = vmor %vm463, %vm464
    %v466 = vsel %vm465, %v458, %v462
    %v467 = vand.u32 2147483647, %v443
    %vm468 = vcmp.eq.f32.partialorder %v467, 8.507059e+37
    %v469 = vand.u32 %v443, 2147483648
    %v470 = vor.u32 1.1754944e-38, %v469
    %v471 = vsel %vm468, %v470, %v466
    %v472 = vmul.f32 %v435, %v457
    %v473 = vmul.f32 %v437, %v471
    %v474 = vpack.c.bf16 %v473, %v472
    %v476 = vsel %vm425, %v474, 0
    %478 = vmatpush.bf16.msra.mxu0 0
    %479 = vmatpush.bf16.msra.mxu0 0
    %480 = vmatpush.bf16.msra.mxu0 0
    %481 = vmatpush.bf16.msra.mxu0 0
    %482 = vmatpush.bf16.msra.mxu0 0
    %483 = vmatpush.bf16.msra.mxu0 0
    %484 = vmatpush.bf16.msra.mxu0 0
    %485 = vmatpush.bf16.msra.mxu0 %v396
    %486 = vmatmul.bf16.gmra.mxu0 %v476
    %v487 = vpop.f32.mrf.mxu0
    %v488 = vadd.f32 0.0, %v487
    %v489 = vpop.f32.mrf.mxu0
    %v490 = vadd.f32 0.0, %v489
    %491 = vdwg.mxu0
    %v492 = vpack.c.bf16 %v490, %v488
    %493 = vrot.lane.b32.xlu0 %v395, 96
    %v494 = vpop.permute.xlu0 %493
    %495 = vrot.lane.b32.xlu0 %v395, 32
    %v496 = vpop.permute.xlu0 %495
    %v498 = vsel %vm400, %v494, 0
    %v501 = vsel %vm400, %v496, 0
    %503 = vmatpush.bf16.xpose.msra.mxu0 0
    %504 = vmatpush.bf16.xpose.msra.mxu0 0
    %505 = vmatpush.bf16.xpose.msra.mxu0 0
    %506 = vmatpush.bf16.xpose.msra.mxu0 0
    %507 = vmatpush.bf16.xpose.msra.mxu0 0
    %508 = vmatpush.bf16.xpose.msra.mxu0 0
    %509 = vmatpush.bf16.xpose.msra.mxu0 0
    %510 = vmatpush.bf16.xpose.msra.mxu0 %v501
    %511 = vmatmul.bf16.gmra.mxu0 %v498
    %v512 = vpop.f32.mrf.mxu0
    %v513 = vadd.f32 0.0, %v512
    %v514 = vpop.f32.mrf.mxu0
    %v515 = vadd.f32 0.0, %v514
    %516 = vdwg.mxu0
    %v517 = vmul.f32 %v513, 0.17677669
    %v518 = vmul.f32 %v515, 0.17677669
    %v519 = vadd.f32 %v517, %v182
    %v520 = vadd.f32 %v518, %v182
    %v521 = vsel %vm425, %v519, -inf
    %522 = vmax.xlane.f32.xlu0 %v521
    %v523 = vpop.xlane.xlu0 %522
    %v524 = vsel %vm425, %v520, -inf
    %525 = vmax.xlane.f32.xlu0 %v524
    %v526 = vpop.xlane.xlu0 %525
    %v527 = vsub.f32 %v519, %v523
    %v528 = vsub.f32 %v520, %v526
    %v529 = vmul.f32 %v527, 1.442695
    %v530 = vpow.pop %v529
    %v531 = vmul.f32 %v528, 1.442695
    %v532 = vpow.pop %v531
    %v533 = vsel %vm425, %v530, 0.0
    %534 = vadd.xlane.f32.xlu0 %v533
    %v535 = vpop.xlane.xlu0 %534
    %v536 = vsel %vm425, %v532, 0.0
    %537 = vadd.xlane.f32.xlu0 %v536
    %v538 = vpop.xlane.xlu0 %537
    %v539 = vrcp.pop %v535
    %v540 = vmul.f32 %v535, %v539
    %v541 = vsub.f32 1.0, %v540
    %v542 = vmul.f32 %v539, %v541
    %v543 = vadd.f32 %v539, %v542
    %vm544 = vweird.f32 %v535
    %vm545 = vweird.f32 %v539
    %vm546 = vmor %vm544, %vm545
    %v547 = vsel %vm546, %v539, %v543
    %v548 = vand.u32 2147483647, %v535
    %vm549 = vcmp.eq.f32.partialorder %v548, 8.507059e+37
    %v550 = vand.u32 %v535, 2147483648
    %v551 = vor.u32 1.1754944e-38, %v550
    %v552 = vsel %vm549, %v551, %v547
    %v553 = vrcp.pop %v538
    %v554 = vmul.f32 %v538, %v553
    %v555 = vsub.f32 1.0, %v554
    %v556 = vmul.f32 %v553, %v555
    %v557 = vadd.f32 %v553, %v556
    %vm558 = vweird.f32 %v538
    %vm559 = vweird.f32 %v553
    %vm560 = vmor %vm558, %vm559
    %v561 = vsel %vm560, %v553, %v557
    %v562 = vand.u32 2147483647, %v538
    %vm563 = vcmp.eq.f32.partialorder %v562, 8.507059e+37
    %v564 = vand.u32 %v538, 2147483648
    %v565 = vor.u32 1.1754944e-38, %v564
    %v566 = vsel %vm563, %v565, %v561
    %v567 = vmul.f32 %v530, %v552
    %v568 = vmul.f32 %v532, %v566
    %v569 = vpack.c.bf16 %v568, %v567
    %571 = vrot.lane.b32.xlu0 %v396, 96
    %v572 = vpop.permute.xlu0 %571
    %v575 = vsel %vm425, %v569, 0
    %577 = vmatpush.bf16.msra.mxu0 0
    %578 = vmatpush.bf16.msra.mxu0 0
    %579 = vmatpush.bf16.msra.mxu0 0
    %580 = vmatpush.bf16.msra.mxu0 0
    %581 = vmatpush.bf16.msra.mxu0 0
    %582 = vmatpush.bf16.msra.mxu0 0
    %583 = vmatpush.bf16.msra.mxu0 0
    %584 = vmatpush.bf16.msra.mxu0 %v572
    %585 = vmatmul.bf16.gmra.mxu0 %v575
    %v586 = vpop.f32.mrf.mxu0
    %v587 = vadd.f32 0.0, %v586
    %v588 = vpop.f32.mrf.mxu0
    %v589 = vadd.f32 0.0, %v588
    %590 = vdwg.mxu0
    %v591 = vpack.c.bf16 %v589, %v587
    %v596 = vunpack.c.l.b16 %v197
    %v597 = vunpack.c.l.b16 %v198
    %v598 = vunpack.c.l.b16 %v199
    %v599 = vunpack.c.l.b16 %v200
    %v600 = vpack.c.b16 %v597, %v596
    %v601 = vpack.c.b16 %v599, %v598
    %v605 = vsel %vm400, %v591, 0
    %607 = vmatpush.bf16.msra.mxu0 0
    %608 = vmatpush.bf16.msra.mxu0 0
    %609 = vmatpush.bf16.msra.mxu0 0
    %610 = vmatpush.bf16.msra.mxu0 0
    %611 = vmatpush.bf16.msra.mxu0 0
    %612 = vmatpush.bf16.msra.mxu0 0
    %613 = vmatpush.bf16.msra.mxu0 %v601
    %614 = vmatpush.bf16.msra.mxu0 %v600
    %615 = vmatmul.bf16.gmra.mxu0 %v605
    %v616 = vpop.f32.mrf.mxu0
    %v617 = vadd.f32 0.0, %v616
    %v618 = vpop.f32.mrf.mxu0
    %v619 = vadd.f32 0.0, %v618
    %620 = vdwg.mxu0
    %v625 = vunpack.c.l.b16 %v193
    %v626 = vunpack.c.l.b16 %v194
    %v627 = vunpack.c.l.b16 %v195
    %v628 = vunpack.c.l.b16 %v196
    %v629 = vpack.c.b16 %v626, %v625
    %v630 = vpack.c.b16 %v628, %v627
    %v634 = vsel %vm400, %v492, 0
    %636 = vmatpush.bf16.msra.mxu0 0
    %637 = vmatpush.bf16.msra.mxu0 0
    %638 = vmatpush.bf16.msra.mxu0 0
    %639 = vmatpush.bf16.msra.mxu0 0
    %640 = vmatpush.bf16.msra.mxu0 0
    %641 = vmatpush.bf16.msra.mxu0 0
    %642 = vmatpush.bf16.msra.mxu0 %v630
    %643 = vmatpush.bf16.msra.mxu0 %v629
    %644 = vmatmul.bf16.gmra.mxu0 %v634
    %v645 = vpop.f32.mrf.mxu0
    %v646 = vadd.f32 %v617, %v645
    %v647 = vpop.f32.mrf.mxu0
    %v648 = vadd.f32 %v619, %v647
    %649 = vdwg.mxu0
    %v650 = vpack.c.bf16 %v374, %v372
    %v651 = vpack.c.bf16 %v393, %v391
    %653 = vrot.lane.b32.xlu0 %v650, 64
    %v654 = vpop.permute.xlu0 %653
    %v656 = vsel %vm400, %v650, 0
    %v659 = vsel %vm400, %v654, 0
    %661 = vmatpush.bf16.xpose.msra.mxu0 0
    %662 = vmatpush.bf16.xpose.msra.mxu0 0
    %663 = vmatpush.bf16.xpose.msra.mxu0 0
    %664 = vmatpush.bf16.xpose.msra.mxu0 0
    %665 = vmatpush.bf16.xpose.msra.mxu0 0
    %666 = vmatpush.bf16.xpose.msra.mxu0 0
    %667 = vmatpush.bf16.xpose.msra.mxu0 0
    %668 = vmatpush.bf16.xpose.msra.mxu0 %v659
    %669 = vmatmul.bf16.gmra.mxu0 %v656
    %v670 = vpop.f32.mrf.mxu0
    %v671 = vadd.f32 0.0, %v670
    %v672 = vpop.f32.mrf.mxu0
    %v673 = vadd.f32 0.0, %v672
    %674 = vdwg.mxu0
    %v675 = vmul.f32 %v671, 0.17677669
    %v676 = vmul.f32 %v673, 0.17677669
    %v677 = vadd.f32 %v675, %v183
    %v678 = vadd.f32 %v676, %v183
    %v679 = vsel %vm425, %v677, -inf
    %680 = vmax.xlane.f32.xlu0 %v679
    %v681 = vpop.xlane.xlu0 %680
    %v682 = vsel %vm425, %v678, -inf
    %683 = vmax.xlane.f32.xlu0 %v682
    %v684 = vpop.xlane.xlu0 %683
    %v685 = vsub.f32 %v677, %v681
    %v686 = vsub.f32 %v678, %v684
    %v687 = vmul.f32 %v685, 1.442695
    %v688 = vpow.pop %v687
    %v689 = vmul.f32 %v686, 1.442695
    %v690 = vpow.pop %v689
    %v691 = vsel %vm425, %v688, 0.0
    %692 = vadd.xlane.f32.xlu0 %v691
    %v693 = vpop.xlane.xlu0 %692
    %v694 = vsel %vm425, %v690, 0.0
    %695 = vadd.xlane.f32.xlu0 %v694
    %v696 = vpop.xlane.xlu0 %695
    %v697 = vrcp.pop %v693
    %v698 = vmul.f32 %v693, %v697
    %v699 = vsub.f32 1.0, %v698
    %v700 = vmul.f32 %v697, %v699
    %v701 = vadd.f32 %v697, %v700
    %vm702 = vweird.f32 %v693
    %vm703 = vweird.f32 %v697
    %vm704 = vmor %vm702, %vm703
    %v705 = vsel %vm704, %v697, %v701
    %v706 = vand.u32 2147483647, %v693
    %vm707 = vcmp.eq.f32.partialorder %v706, 8.507059e+37
    %v708 = vand.u32 %v693, 2147483648
    %v709 = vor.u32 1.1754944e-38, %v708
    %v710 = vsel %vm707, %v709, %v705
    %v711 = vrcp.pop %v696
    %v712 = vmul.f32 %v696, %v711
    %v713 = vsub.f32 1.0, %v712
    %v714 = vmul.f32 %v711, %v713
    %v715 = vadd.f32 %v711, %v714
    %vm716 = vweird.f32 %v696
    %vm717 = vweird.f32 %v711
    %vm718 = vmor %vm716, %vm717
    %v719 = vsel %vm718, %v711, %v715
    %v720 = vand.u32 2147483647, %v696
    %vm721 = vcmp.eq.f32.partialorder %v720, 8.507059e+37
    %v722 = vand.u32 %v696, 2147483648
    %v723 = vor.u32 1.1754944e-38, %v722
    %v724 = vsel %vm721, %v723, %v719
    %v725 = vmul.f32 %v688, %v710
    %v726 = vmul.f32 %v690, %v724
    %v727 = vpack.c.bf16 %v726, %v725
    %v729 = vsel %vm425, %v727, 0
    %731 = vmatpush.bf16.msra.mxu0 0
    %732 = vmatpush.bf16.msra.mxu0 0
    %733 = vmatpush.bf16.msra.mxu0 0
    %734 = vmatpush.bf16.msra.mxu0 0
    %735 = vmatpush.bf16.msra.mxu0 0
    %736 = vmatpush.bf16.msra.mxu0 0
    %737 = vmatpush.bf16.msra.mxu0 0
    %738 = vmatpush.bf16.msra.mxu0 %v651
    %739 = vmatmul.bf16.gmra.mxu0 %v729
    %v740 = vpop.f32.mrf.mxu0
    %v741 = vadd.f32 0.0, %v740
    %v742 = vpop.f32.mrf.mxu0
    %v743 = vadd.f32 0.0, %v742
    %744 = vdwg.mxu0
    %v745 = vpack.c.bf16 %v743, %v741
    %746 = vrot.lane.b32.xlu0 %v650, 96
    %v747 = vpop.permute.xlu0 %746
    %748 = vrot.lane.b32.xlu0 %v650, 32
    %v749 = vpop.permute.xlu0 %748
    %v751 = vsel %vm400, %v747, 0
    %v754 = vsel %vm400, %v749, 0
    %756 = vmatpush.bf16.xpose.msra.mxu0 0
    %757 = vmatpush.bf16.xpose.msra.mxu0 0
    %758 = vmatpush.bf16.xpose.msra.mxu0 0
    %759 = vmatpush.bf16.xpose.msra.mxu0 0
    %760 = vmatpush.bf16.xpose.msra.mxu0 0
    %761 = vmatpush.bf16.xpose.msra.mxu0 0
    %762 = vmatpush.bf16.xpose.msra.mxu0 0
    %763 = vmatpush.bf16.xpose.msra.mxu0 %v754
    %764 = vmatmul.bf16.gmra.mxu0 %v751
    %v765 = vpop.f32.mrf.mxu0
    %v766 = vadd.f32 0.0, %v765
    %v767 = vpop.f32.mrf.mxu0
    %v768 = vadd.f32 0.0, %v767
    %769 = vdwg.mxu0
    %v770 = vmul.f32 %v766, 0.17677669
    %v771 = vmul.f32 %v768, 0.17677669
    %v772 = vadd.f32 %v770, %v183
    %v773 = vadd.f32 %v771, %v183
    %v774 = vsel %vm425, %v772, -inf
    %775 = vmax.xlane.f32.xlu0 %v774
    %v776 = vpop.xlane.xlu0 %775
    %v777 = vsel %vm425, %v773, -inf
    %778 = vmax.xlane.f32.xlu0 %v777
    %v779 = vpop.xlane.xlu0 %778
    %v780 = vsub.f32 %v772, %v776
    %v781 = vsub.f32 %v773, %v779
    %v782 = vmul.f32 %v780, 1.442695
    %v783 = vpow.pop %v782
    %v784 = vmul.f32 %v781, 1.442695
    %v785 = vpow.pop %v784
    %v786 = vsel %vm425, %v783, 0.0
    %787 = vadd.xlane.f32.xlu0 %v786
    %v788 = vpop.xlane.xlu0 %787
    %v789 = vsel %vm425, %v785, 0.0
    %790 = vadd.xlane.f32.xlu0 %v789
    %v791 = vpop.xlane.xlu0 %790
    %v792 = vrcp.pop %v788
    %v793 = vmul.f32 %v788, %v792
    %v794 = vsub.f32 1.0, %v793
    %v795 = vmul.f32 %v792, %v794
    %v796 = vadd.f32 %v792, %v795
    %vm797 = vweird.f32 %v788
    %vm798 = vweird.f32 %v792
    %vm799 = vmor %vm797, %vm798
    %v800 = vsel %vm799, %v792, %v796
    %v801 = vand.u32 2147483647, %v788
    %vm802 = vcmp.eq.f32.partialorder %v801, 8.507059e+37
    %v803 = vand.u32 %v788, 2147483648
    %v804 = vor.u32 1.1754944e-38, %v803
    %v805 = vsel %vm802, %v804, %v800
    %v806 = vrcp.pop %v791
    %v807 = vmul.f32 %v791, %v806
    %v808 = vsub.f32 1.0, %v807
    %v809 = vmul.f32 %v806, %v808
    %v810 = vadd.f32 %v806, %v809
    %vm811 = vweird.f32 %v791
    %vm812 = vweird.f32 %v806
    %vm813 = vmor %vm811, %vm812
    %v814 = vsel %vm813, %v806, %v810
    %v815 = vand.u32 2147483647, %v791
    %vm816 = vcmp.eq.f32.partialorder %v815, 8.507059e+37
    %v817 = vand.u32 %v791, 2147483648
    %v818 = vor.u32 1.1754944e-38, %v817
    %v819 = vsel %vm816, %v818, %v814
    %v820 = vmul.f32 %v783, %v805
    %v821 = vmul.f32 %v785, %v819
    %v822 = vpack.c.bf16 %v821, %v820
    %824 = vrot.lane.b32.xlu0 %v651, 96
    %v825 = vpop.permute.xlu0 %824
    %v828 = vsel %vm425, %v822, 0
    %830 = vmatpush.bf16.msra.mxu0 0
    %831 = vmatpush.bf16.msra.mxu0 0
    %832 = vmatpush.bf16.msra.mxu0 0
    %833 = vmatpush.bf16.msra.mxu0 0
    %834 = vmatpush.bf16.msra.mxu0 0
    %835 = vmatpush.bf16.msra.mxu0 0
    %836 = vmatpush.bf16.msra.mxu0 0
    %837 = vmatpush.bf16.msra.mxu0 %v825
    %838 = vmatmul.bf16.gmra.mxu0 %v828
    %v839 = vpop.f32.mrf.mxu0
    %v840 = vadd.f32 0.0, %v839
    %v841 = vpop.f32.mrf.mxu0
    %v842 = vadd.f32 0.0, %v841
    %843 = vdwg.mxu0
    %v844 = vpack.c.bf16 %v842, %v840
    %v846 = vsel %vm400, %v844, 0
    %848 = vmatpush.bf16.msra.mxu0 0
    %849 = vmatpush.bf16.msra.mxu0 0
    %850 = vmatpush.bf16.msra.mxu0 0
    %851 = vmatpush.bf16.msra.mxu0 0
    %852 = vmatpush.bf16.msra.mxu0 0
    %853 = vmatpush.bf16.msra.mxu0 0
    %854 = vmatpush.bf16.msra.mxu0 %v601
    %855 = vmatpush.bf16.msra.mxu0 %v600
    %856 = vmatmul.bf16.gmra.mxu0 %v846
    %v857 = vpop.f32.mrf.mxu0
    %v858 = vadd.f32 0.0, %v857
    %v859 = vpop.f32.mrf.mxu0
    %v860 = vadd.f32 0.0, %v859
    %861 = vdwg.mxu0
    %v863 = vsel %vm400, %v745, 0
    %865 = vmatpush.bf16.msra.mxu0 0
    %866 = vmatpush.bf16.msra.mxu0 0
    %867 = vmatpush.bf16.msra.mxu0 0
    %868 = vmatpush.bf16.msra.mxu0 0
    %869 = vmatpush.bf16.msra.mxu0 0
    %870 = vmatpush.bf16.msra.mxu0 0
    %871 = vmatpush.bf16.msra.mxu0 %v630
    %872 = vmatpush.bf16.msra.mxu0 %v629
    %873 = vmatmul.bf16.gmra.mxu0 %v863
    %v874 = vpop.f32.mrf.mxu0
    %v875 = vadd.f32 %v858, %v874
    %v876 = vpop.f32.mrf.mxu0
    %v877 = vadd.f32 %v860, %v876
    %878 = vdwg.mxu0
    %v879 = vadd.f32 %v168, %v646
    %v880 = vadd.f32 %v171, %v648
    %v881 = vadd.f32 %v174, %v875
    %v882 = vadd.f32 %v177, %v877
    %v883 = vmul.f32 %v879, %v879
    %v884 = vmul.f32 %v880, %v880
    %v885 = vmul.f32 %v881, %v881
    %v886 = vmul.f32 %v882, %v882
    %v887 = vsel %vm230, %v883, 0.0
    %888 = vadd.xlane.f32.xlu0 %v887
    %v889 = vpop.xlane.xlu0 %888
    %v890 = vsel %vm230, %v884, 0.0
    %891 = vadd.xlane.f32.xlu0 %v890
    %v892 = vpop.xlane.xlu0 %891
    %v893 = vsel %vm230, %v885, 0.0
    %894 = vadd.xlane.f32.xlu0 %v893
    %v895 = vpop.xlane.xlu0 %894
    %v896 = vsel %vm230, %v886, 0.0
    %897 = vadd.xlane.f32.xlu0 %v896
    %v898 = vpop.xlane.xlu0 %897
    %v899 = vmul.f32 %v889, %v249
    %v900 = vmul.f32 %v892, %v249
    %v901 = vmul.f32 %v895, %v249
    %v902 = vmul.f32 %v898, %v249
    %v903 = vadd.f32 %v899, 1e-06
    %v904 = vadd.f32 %v900, 1e-06
    %v905 = vadd.f32 %v901, 1e-06
    %v906 = vadd.f32 %v902, 1e-06
    %v907 = vrsqrt.pop %v903
    %v908 = vmul.f32 %v907, %v903
    %v909 = vmul.f32 %v908, %v907
    %v910 = vmul.f32 0.5, %v909
    %v911 = vsub.f32 1.5, %v910
    %v912 = vmul.f32 %v907, %v911
    %vm913 = vweird.f32 %v903
    %vm914 = vweird.f32 %v907
    %vm915 = vmor %vm913, %vm914
    %v916 = vsel %vm915, %v907, %v912
    %v917 = vrsqrt.pop %v904
    %v918 = vmul.f32 %v917, %v904
    %v919 = vmul.f32 %v918, %v917
    %v920 = vmul.f32 0.5, %v919
    %v921 = vsub.f32 1.5, %v920
    %v922 = vmul.f32 %v917, %v921
    %vm923 = vweird.f32 %v904
    %vm924 = vweird.f32 %v917
    %vm925 = vmor %vm923, %vm924
    %v926 = vsel %vm925, %v917, %v922
    %v927 = vrsqrt.pop %v905
    %v928 = vmul.f32 %v927, %v905
    %v929 = vmul.f32 %v928, %v927
    %v930 = vmul.f32 0.5, %v929
    %v931 = vsub.f32 1.5, %v930
    %v932 = vmul.f32 %v927, %v931
    %vm933 = vweird.f32 %v905
    %vm934 = vweird.f32 %v927
    %vm935 = vmor %vm933, %vm934
    %v936 = vsel %vm935, %v927, %v932
    %v937 = vrsqrt.pop %v906
    %v938 = vmul.f32 %v937, %v906
    %v939 = vmul.f32 %v938, %v937
    %v940 = vmul.f32 0.5, %v939
    %v941 = vsub.f32 1.5, %v940
    %v942 = vmul.f32 %v937, %v941
    %vm943 = vweird.f32 %v906
    %vm944 = vweird.f32 %v937
    %vm945 = vmor %vm943, %vm944
    %v946 = vsel %vm945, %v937, %v942
    %v947 = vmul.f32 %v879, %v916
    %v948 = vmul.f32 %v880, %v926
    %v949 = vmul.f32 %v881, %v936
    %v950 = vmul.f32 %v882, %v946
    %v952 = vperm.slane %v201, 0
    %v954 = vmul.f32 %v947, %v952
    %v955 = vmul.f32 %v948, %v952
    %v956 = vmul.f32 %v949, %v952
    %v957 = vmul.f32 %v950, %v952
    %v958 = vpack.c.bf16 %v955, %v954
    %v959 = vpack.c.bf16 %v957, %v956
    %v968 = vunpack.c.l.b16 %v202
    %v969 = vunpack.c.l.b16 %v203
    %v970 = vunpack.c.l.b16 %v204
    %v971 = vunpack.c.l.b16 %v205
    %v972 = vunpack.c.l.b16 %v206
    %v973 = vunpack.c.l.b16 %v207
    %v974 = vunpack.c.l.b16 %v208
    %v975 = vunpack.c.l.b16 %v209
    %v976 = vpack.c.b16 %v969, %v968
    %v977 = vpack.c.b16 %v971, %v970
    %v978 = vpack.c.b16 %v973, %v972
    %v979 = vpack.c.b16 %v975, %v974
    %v985 = vsel %vm230, %v958, 0
    %v988 = vsel %vm230, %v959, 0
    %990 = vmatpush.bf16.msra.mxu0 0
    %991 = vmatpush.bf16.msra.mxu0 0
    %992 = vmatpush.bf16.msra.mxu0 0
    %993 = vmatpush.bf16.msra.mxu0 0
    %994 = vmatpush.bf16.msra.mxu0 %v979
    %995 = vmatpush.bf16.msra.mxu0 %v978
    %996 = vmatpush.bf16.msra.mxu0 %v977
    %997 = vmatpush.bf16.msra.mxu0 %v976
    %998 = vmatmul.bf16.gmra.mxu0 %v985
    %v999 = vpop.f32.mrf.mxu0
    %v1000 = vadd.f32 0.0, %v999
    %v1001 = vpop.f32.mrf.mxu0
    %v1002 = vadd.f32 0.0, %v1001
    %1003 = vmatmul.bf16.gmra.mxu0 %v988
    %v1004 = vpop.f32.mrf.mxu0
    %v1005 = vadd.f32 0.0, %v1004
    %v1006 = vpop.f32.mrf.mxu0
    %v1007 = vadd.f32 0.0, %v1006
    %1008 = vdwg.mxu0
    %v1009 = vmax.f32 %v1000, 0.0
    %v1010 = vmax.f32 %v1002, 0.0
    %v1011 = vmax.f32 %v1005, 0.0
    %v1012 = vmax.f32 %v1007, 0.0
    %v1013 = vpack.c.bf16 %v1010, %v1009
    %v1014 = vpack.c.bf16 %v1012, %v1011
    %v1031 = vunpack.c.l.b16 %v210
    %v1032 = vunpack.c.l.b16 %v211
    %v1033 = vunpack.c.l.b16 %v212
    %v1034 = vunpack.c.l.b16 %v213
    %v1035 = vunpack.c.l.b16 %v214
    %v1036 = vunpack.c.l.b16 %v215
    %v1037 = vunpack.c.l.b16 %v216
    %v1038 = vunpack.c.l.b16 %v217
    %v1039 = vunpack.c.l.b16 %v218
    %v1040 = vunpack.c.l.b16 %v219
    %v1041 = vunpack.c.l.b16 %v220
    %v1042 = vunpack.c.l.b16 %v221
    %v1043 = vunpack.c.l.b16 %v222
    %v1044 = vunpack.c.l.b16 %v223
    %v1045 = vunpack.c.l.b16 %v224
    %v1046 = vunpack.c.l.b16 %v225
    %v1047 = vpack.c.b16 %v1032, %v1031
    %v1048 = vpack.c.b16 %v1034, %v1033
    %v1049 = vpack.c.b16 %v1036, %v1035
    %v1050 = vpack.c.b16 %v1038, %v1037
    %v1051 = vpack.c.b16 %v1040, %v1039
    %v1052 = vpack.c.b16 %v1042, %v1041
    %v1053 = vpack.c.b16 %v1044, %v1043
    %v1054 = vpack.c.b16 %v1046, %v1045
    %1063 = vmatpush.bf16.msra.mxu0 %v1054
    %1064 = vmatpush.bf16.msra.mxu0 %v1053
    %1065 = vmatpush.bf16.msra.mxu0 %v1052
    %1066 = vmatpush.bf16.msra.mxu0 %v1051
    %1067 = vmatpush.bf16.msra.mxu0 %v1050
    %1068 = vmatpush.bf16.msra.mxu0 %v1049
    %1069 = vmatpush.bf16.msra.mxu0 %v1048
    %1070 = vmatpush.bf16.msra.mxu0 %v1047
    %1071 = vmatmul.bf16.gmra.mxu0 %v1013
    %v1072 = vpop.f32.mrf.mxu0
    %v1073 = vadd.f32 0.0, %v1072
    %v1074 = vpop.f32.mrf.mxu0
    %v1075 = vadd.f32 0.0, %v1074
    %1076 = vmatmul.bf16.gmra.mxu0 %v1014
    %v1077 = vpop.f32.mrf.mxu0
    %v1078 = vadd.f32 0.0, %v1077
    %v1079 = vpop.f32.mrf.mxu0
    %v1080 = vadd.f32 0.0, %v1079
    %1081 = vdwg.mxu0
    %v1082 = vadd.f32 %v879, %v1073
    %v1083 = vadd.f32 %v880, %v1075
    %v1084 = vadd.f32 %v881, %v1078
    %v1085 = vadd.f32 %v882, %v1080
    %s1086 = scalar_lea.vmem %s3, 1
    %v1087 = vld [vmem:[%s1086] sm:$0x1]
    %s1088 = scalar_lea.vmem %s4, 64
    %v1089 = vld [vmem:[%s1088] sm:$0xff]
    %v1090 = vld [vmem:[%s1088 + $0x8] sm:$0xff]
    %v1091 = vld [vmem:[%s1088 + $0x10] sm:$0xff]
    %v1092 = vld [vmem:[%s1088 + $0x18] sm:$0xff]
    %v1093 = vld [vmem:[%s1088 + $0x20] sm:$0xff]
    %v1094 = vld [vmem:[%s1088 + $0x28] sm:$0xff]
    %v1095 = vld [vmem:[%s1088 + $0x30] sm:$0xff]
    %v1096 = vld [vmem:[%s1088 + $0x38] sm:$0xff]
    %s1097 = scalar_lea.vmem %s5, 32
    %v1098 = vld [vmem:[%s1097] sm:$0xf]
    %v1099 = vld [vmem:[%s1097 + $0x4] sm:$0xf]
    %v1100 = vld [vmem:[%s1097 + $0x8] sm:$0xf]
    %v1101 = vld [vmem:[%s1097 + $0xc] sm:$0xf]
    %v1102 = vld [vmem:[%s1097 + $0x10] sm:$0xf]
    %v1103 = vld [vmem:[%s1097 + $0x14] sm:$0xf]
    %v1104 = vld [vmem:[%s1097 + $0x18] sm:$0xf]
    %v1105 = vld [vmem:[%s1097 + $0x1c] sm:$0xf]
    %s1106 = scalar_lea.vmem %s6, 1
    %v1107 = vld [vmem:[%s1106] sm:$0x1]
    %s1108 = scalar_lea.vmem %s7, 32
    %v1109 = vld [vmem:[%s1108] sm:$0xf]
    %v1110 = vld [vmem:[%s1108 + $0x4] sm:$0xf]
    %v1111 = vld [vmem:[%s1108 + $0x8] sm:$0xf]
    %v1112 = vld [vmem:[%s1108 + $0xc] sm:$0xf]
    %v1113 = vld [vmem:[%s1108 + $0x10] sm:$0xf]
    %v1114 = vld [vmem:[%s1108 + $0x14] sm:$0xf]
    %v1115 = vld [vmem:[%s1108 + $0x18] sm:$0xf]
    %v1116 = vld [vmem:[%s1108 + $0x1c] sm:$0xf]
    %s1117 = scalar_lea.vmem %s8, 64
    %v1118 = vld [vmem:[%s1117] sm:$0xf]
    %v1119 = vld [vmem:[%s1117 + $0x4] sm:$0xf]
    %v1120 = vld [vmem:[%s1117 + $0x8] sm:$0xf]
    %v1121 = vld [vmem:[%s1117 + $0xc] sm:$0xf]
    %v1122 = vld [vmem:[%s1117 + $0x10] sm:$0xf]
    %v1123 = vld [vmem:[%s1117 + $0x14] sm:$0xf]
    %v1124 = vld [vmem:[%s1117 + $0x18] sm:$0xf]
    %v1125 = vld [vmem:[%s1117 + $0x1c] sm:$0xf]
    %v1126 = vld [vmem:[%s1117 + $0x20] sm:$0xf]
    %v1127 = vld [vmem:[%s1117 + $0x24] sm:$0xf]
    %v1128 = vld [vmem:[%s1117 + $0x28] sm:$0xf]
    %v1129 = vld [vmem:[%s1117 + $0x2c] sm:$0xf]
    %v1130 = vld [vmem:[%s1117 + $0x30] sm:$0xf]
    %v1131 = vld [vmem:[%s1117 + $0x34] sm:$0xf]
    %v1132 = vld [vmem:[%s1117 + $0x38] sm:$0xf]
    %v1133 = vld [vmem:[%s1117 + $0x3c] sm:$0xf]
    %v1134 = vmul.f32 %v1082, %v1082
    %v1135 = vmul.f32 %v1083, %v1083
    %v1136 = vmul.f32 %v1084, %v1084
    %v1137 = vmul.f32 %v1085, %v1085
    %v1138 = vsel %vm230, %v1134, 0.0
    %1139 = vadd.xlane.f32.xlu0 %v1138
    %v1140 = vpop.xlane.xlu0 %1139
    %v1141 = vsel %vm230, %v1135, 0.0
    %1142 = vadd.xlane.f32.xlu0 %v1141
    %v1143 = vpop.xlane.xlu0 %1142
    %v1144 = vsel %vm230, %v1136, 0.0
    %1145 = vadd.xlane.f32.xlu0 %v1144
    %v1146 = vpop.xlane.xlu0 %1145
    %v1147 = vsel %vm230, %v1137, 0.0
    %1148 = vadd.xlane.f32.xlu0 %v1147
    %v1149 = vpop.xlane.xlu0 %1148
    %v1150 = vmul.f32 %v1140, %v249
    %v1151 = vmul.f32 %v1143, %v249
    %v1152 = vmul.f32 %v1146, %v249
    %v1153 = vmul.f32 %v1149, %v249
    %v1154 = vadd.f32 %v1150, 1e-06
    %v1155 = vadd.f32 %v1151, 1e-06
    %v1156 = vadd.f32 %v1152, 1e-06
    %v1157 = vadd.f32 %v1153, 1e-06
    %v1158 = vrsqrt.pop %v1154
    %v1159 = vmul.f32 %v1158, %v1154
    %v1160 = vmul.f32 %v1159, %v1158
    %v1161 = vmul.f32 0.5, %v1160
    %v1162 = vsub.f32 1.5, %v1161
    %v1163 = vmul.f32 %v1158, %v1162
    %vm1164 = vweird.f32 %v1154
    %vm1165 = vweird.f32 %v1158
    %vm1166 = vmor %vm1164, %vm1165
    %v1167 = vsel %vm1166, %v1158, %v1163
    %v1168 = vrsqrt.pop %v1155
    %v1169 = vmul.f32 %v1168, %v1155
    %v1170 = vmul.f32 %v1169, %v1168
    %v1171 = vmul.f32 0.5, %v1170
    %v1172 = vsub.f32 1.5, %v1171
    %v1173 = vmul.f32 %v1168, %v1172
    %vm1174 = vweird.f32 %v1155
    %vm1175 = vweird.f32 %v1168
    %vm1176 = vmor %vm1174, %vm1175
    %v1177 = vsel %vm1176, %v1168, %v1173
    %v1178 = vrsqrt.pop %v1156
    %v1179 = vmul.f32 %v1178, %v1156
    %v1180 = vmul.f32 %v1179, %v1178
    %v1181 = vmul.f32 0.5, %v1180
    %v1182 = vsub.f32 1.5, %v1181
    %v1183 = vmul.f32 %v1178, %v1182
    %vm1184 = vweird.f32 %v1156
    %vm1185 = vweird.f32 %v1178
    %vm1186 = vmor %vm1184, %vm1185
    %v1187 = vsel %vm1186, %v1178, %v1183
    %v1188 = vrsqrt.pop %v1157
    %v1189 = vmul.f32 %v1188, %v1157
    %v1190 = vmul.f32 %v1189, %v1188
    %v1191 = vmul.f32 0.5, %v1190
    %v1192 = vsub.f32 1.5, %v1191
    %v1193 = vmul.f32 %v1188, %v1192
    %vm1194 = vweird.f32 %v1157
    %vm1195 = vweird.f32 %v1188
    %vm1196 = vmor %vm1194, %vm1195
    %v1197 = vsel %vm1196, %v1188, %v1193
    %v1198 = vmul.f32 %v1082, %v1167
    %v1199 = vmul.f32 %v1083, %v1177
    %v1200 = vmul.f32 %v1084, %v1187
    %v1201 = vmul.f32 %v1085, %v1197
    %v1203 = vperm.slane %v1087, 0
    %v1205 = vmul.f32 %v1198, %v1203
    %v1206 = vmul.f32 %v1199, %v1203
    %v1207 = vmul.f32 %v1200, %v1203
    %v1208 = vmul.f32 %v1201, %v1203
    %v1209 = vpack.c.bf16 %v1206, %v1205
    %v1210 = vpack.c.bf16 %v1208, %v1207
    %v1219 = vunpack.c.l.b16 %v1089
    %v1220 = vunpack.c.h.b16 %v1089
    %v1221 = vunpack.c.l.b16 %v1090
    %v1222 = vunpack.c.h.b16 %v1090
    %v1223 = vunpack.c.l.b16 %v1091
    %v1224 = vunpack.c.h.b16 %v1091
    %v1225 = vunpack.c.l.b16 %v1092
    %v1226 = vunpack.c.h.b16 %v1092
    %v1227 = vunpack.c.l.b16 %v1093
    %v1228 = vunpack.c.h.b16 %v1093
    %v1229 = vunpack.c.l.b16 %v1094
    %v1230 = vunpack.c.h.b16 %v1094
    %v1231 = vunpack.c.l.b16 %v1095
    %v1232 = vunpack.c.h.b16 %v1095
    %v1233 = vunpack.c.l.b16 %v1096
    %v1234 = vunpack.c.h.b16 %v1096
    %v1235 = vpack.c.b16 %v1221, %v1219
    %v1236 = vpack.c.b16 %v1222, %v1220
    %v1237 = vpack.c.b16 %v1225, %v1223
    %v1238 = vpack.c.b16 %v1226, %v1224
    %v1239 = vpack.c.b16 %v1229, %v1227
    %v1240 = vpack.c.b16 %v1230, %v1228
    %v1241 = vpack.c.b16 %v1233, %v1231
    %v1242 = vpack.c.b16 %v1234, %v1232
    %v1252 = vsel %vm230, %v1209, 0
    %v1255 = vsel %vm230, %v1210, 0
    %1257 = vmatpush.bf16.msra.mxu0 0
    %1258 = vmatpush.bf16.msra.mxu0 0
    %1259 = vmatpush.bf16.msra.mxu0 0
    %1260 = vmatpush.bf16.msra.mxu0 0
    %1261 = vmatpush.bf16.msra.mxu0 %v1241
    %1262 = vmatpush.bf16.msra.mxu0 %v1239
    %1263 = vmatpush.bf16.msra.mxu0 %v1237
    %1264 = vmatpush.bf16.msra.mxu0 %v1235
    %1265 = vmatmul.bf16.gmra.mxu0 %v1252
    %v1266 = vpop.f32.mrf.mxu0
    %v1267 = vadd.f32 0.0, %v1266
    %v1268 = vpop.f32.mrf.mxu0
    %v1269 = vadd.f32 0.0, %v1268
    %1270 = vmatmul.bf16.gmra.mxu0 %v1255
    %v1271 = vpop.f32.mrf.mxu0
    %v1272 = vadd.f32 0.0, %v1271
    %v1273 = vpop.f32.mrf.mxu0
    %v1274 = vadd.f32 0.0, %v1273
    %1275 = vdwg.mxu0
    %1276 = vmatpush.bf16.msra.mxu0 0
    %1277 = vmatpush.bf16.msra.mxu0 0
    %1278 = vmatpush.bf16.msra.mxu0 0
    %1279 = vmatpush.bf16.msra.mxu0 0
    %1280 = vmatpush.bf16.msra.mxu0 %v1242
    %1281 = vmatpush.bf16.msra.mxu0 %v1240
    %1282 = vmatpush.bf16.msra.mxu0 %v1238
    %1283 = vmatpush.bf16.msra.mxu0 %v1236
    %1284 = vmatmul.bf16.gmra.mxu0 %v1252
    %v1285 = vpop.f32.mrf.mxu0
    %v1286 = vadd.f32 0.0, %v1285
    %v1287 = vpop.f32.mrf.mxu0
    %v1288 = vadd.f32 0.0, %v1287
    %1289 = vmatmul.bf16.gmra.mxu0 %v1255
    %v1290 = vpop.f32.mrf.mxu0
    %v1291 = vadd.f32 0.0, %v1290
    %v1292 = vpop.f32.mrf.mxu0
    %v1293 = vadd.f32 0.0, %v1292
    %1294 = vdwg.mxu0
    %v1295 = vpack.c.bf16 %v1269, %v1267
    %v1296 = vpack.c.bf16 %v1288, %v1286
    %1298 = vrot.lane.b32.xlu0 %v1295, 64
    %v1299 = vpop.permute.xlu0 %1298
    %v1301 = vsel %vm400, %v1295, 0
    %v1304 = vsel %vm400, %v1299, 0
    %1306 = vmatpush.bf16.xpose.msra.mxu0 0
    %1307 = vmatpush.bf16.xpose.msra.mxu0 0
    %1308 = vmatpush.bf16.xpose.msra.mxu0 0
    %1309 = vmatpush.bf16.xpose.msra.mxu0 0
    %1310 = vmatpush.bf16.xpose.msra.mxu0 0
    %1311 = vmatpush.bf16.xpose.msra.mxu0 0
    %1312 = vmatpush.bf16.xpose.msra.mxu0 0
    %1313 = vmatpush.bf16.xpose.msra.mxu0 %v1304
    %1314 = vmatmul.bf16.gmra.mxu0 %v1301
    %v1315 = vpop.f32.mrf.mxu0
    %v1316 = vadd.f32 0.0, %v1315
    %v1317 = vpop.f32.mrf.mxu0
    %v1318 = vadd.f32 0.0, %v1317
    %1319 = vdwg.mxu0
    %v1320 = vmul.f32 %v1316, 0.17677669
    %v1321 = vmul.f32 %v1318, 0.17677669
    %v1322 = vadd.f32 %v1320, %v182
    %v1323 = vadd.f32 %v1321, %v182
    %v1324 = vsel %vm425, %v1322, -inf
    %1325 = vmax.xlane.f32.xlu0 %v1324
    %v1326 = vpop.xlane.xlu0 %1325
    %v1327 = vsel %vm425, %v1323, -inf
    %1328 = vmax.xlane.f32.xlu0 %v1327
    %v1329 = vpop.xlane.xlu0 %1328
    %v1330 = vsub.f32 %v1322, %v1326
    %v1331 = vsub.f32 %v1323, %v1329
    %v1332 = vmul.f32 %v1330, 1.442695
    %v1333 = vpow.pop %v1332
    %v1334 = vmul.f32 %v1331, 1.442695
    %v1335 = vpow.pop %v1334
    %v1336 = vsel %vm425, %v1333, 0.0
    %1337 = vadd.xlane.f32.xlu0 %v1336
    %v1338 = vpop.xlane.xlu0 %1337
    %v1339 = vsel %vm425, %v1335, 0.0
    %1340 = vadd.xlane.f32.xlu0 %v1339
    %v1341 = vpop.xlane.xlu0 %1340
    %v1342 = vrcp.pop %v1338
    %v1343 = vmul.f32 %v1338, %v1342
    %v1344 = vsub.f32 1.0, %v1343
    %v1345 = vmul.f32 %v1342, %v1344
    %v1346 = vadd.f32 %v1342, %v1345
    %vm1347 = vweird.f32 %v1338
    %vm1348 = vweird.f32 %v1342
    %vm1349 = vmor %vm1347, %vm1348
    %v1350 = vsel %vm1349, %v1342, %v1346
    %v1351 = vand.u32 2147483647, %v1338
    %vm1352 = vcmp.eq.f32.partialorder %v1351, 8.507059e+37
    %v1353 = vand.u32 %v1338, 2147483648
    %v1354 = vor.u32 1.1754944e-38, %v1353
    %v1355 = vsel %vm1352, %v1354, %v1350
    %v1356 = vrcp.pop %v1341
    %v1357 = vmul.f32 %v1341, %v1356
    %v1358 = vsub.f32 1.0, %v1357
    %v1359 = vmul.f32 %v1356, %v1358
    %v1360 = vadd.f32 %v1356, %v1359
    %vm1361 = vweird.f32 %v1341
    %vm1362 = vweird.f32 %v1356
    %vm1363 = vmor %vm1361, %vm1362
    %v1364 = vsel %vm1363, %v1356, %v1360
    %v1365 = vand.u32 2147483647, %v1341
    %vm1366 = vcmp.eq.f32.partialorder %v1365, 8.507059e+37
    %v1367 = vand.u32 %v1341, 2147483648
    %v1368 = vor.u32 1.1754944e-38, %v1367
    %v1369 = vsel %vm1366, %v1368, %v1364
    %v1370 = vmul.f32 %v1333, %v1355
    %v1371 = vmul.f32 %v1335, %v1369
    %v1372 = vpack.c.bf16 %v1371, %v1370
    %v1374 = vsel %vm425, %v1372, 0
    %1376 = vmatpush.bf16.msra.mxu0 0
    %1377 = vmatpush.bf16.msra.mxu0 0
    %1378 = vmatpush.bf16.msra.mxu0 0
    %1379 = vmatpush.bf16.msra.mxu0 0
    %1380 = vmatpush.bf16.msra.mxu0 0
    %1381 = vmatpush.bf16.msra.mxu0 0
    %1382 = vmatpush.bf16.msra.mxu0 0
    %1383 = vmatpush.bf16.msra.mxu0 %v1296
    %1384 = vmatmul.bf16.gmra.mxu0 %v1374
    %v1385 = vpop.f32.mrf.mxu0
    %v1386 = vadd.f32 0.0, %v1385
    %v1387 = vpop.f32.mrf.mxu0
    %v1388 = vadd.f32 0.0, %v1387
    %1389 = vdwg.mxu0
    %v1390 = vpack.c.bf16 %v1388, %v1386
    %1391 = vrot.lane.b32.xlu0 %v1295, 96
    %v1392 = vpop.permute.xlu0 %1391
    %1393 = vrot.lane.b32.xlu0 %v1295, 32
    %v1394 = vpop.permute.xlu0 %1393
    %v1396 = vsel %vm400, %v1392, 0
    %v1399 = vsel %vm400, %v1394, 0
    %1401 = vmatpush.bf16.xpose.msra.mxu0 0
    %1402 = vmatpush.bf16.xpose.msra.mxu0 0
    %1403 = vmatpush.bf16.xpose.msra.mxu0 0
    %1404 = vmatpush.bf16.xpose.msra.mxu0 0
    %1405 = vmatpush.bf16.xpose.msra.mxu0 0
    %1406 = vmatpush.bf16.xpose.msra.mxu0 0
    %1407 = vmatpush.bf16.xpose.msra.mxu0 0
    %1408 = vmatpush.bf16.xpose.msra.mxu0 %v1399
    %1409 = vmatmul.bf16.gmra.mxu0 %v1396
    %v1410 = vpop.f32.mrf.mxu0
    %v1411 = vadd.f32 0.0, %v1410
    %v1412 = vpop.f32.mrf.mxu0
    %v1413 = vadd.f32 0.0, %v1412
    %1414 = vdwg.mxu0
    %v1415 = vmul.f32 %v1411, 0.17677669
    %v1416 = vmul.f32 %v1413, 0.17677669
    %v1417 = vadd.f32 %v1415, %v182
    %v1418 = vadd.f32 %v1416, %v182
    %v1419 = vsel %vm425, %v1417, -inf
    %1420 = vmax.xlane.f32.xlu0 %v1419
    %v1421 = vpop.xlane.xlu0 %1420
    %v1422 = vsel %vm425, %v1418, -inf
    %1423 = vmax.xlane.f32.xlu0 %v1422
    %v1424 = vpop.xlane.xlu0 %1423
    %v1425 = vsub.f32 %v1417, %v1421
    %v1426 = vsub.f32 %v1418, %v1424
    %v1427 = vmul.f32 %v1425, 1.442695
    %v1428 = vpow.pop %v1427
    %v1429 = vmul.f32 %v1426, 1.442695
    %v1430 = vpow.pop %v1429
    %v1431 = vsel %vm425, %v1428, 0.0
    %1432 = vadd.xlane.f32.xlu0 %v1431
    %v1433 = vpop.xlane.xlu0 %1432
    %v1434 = vsel %vm425, %v1430, 0.0
    %1435 = vadd.xlane.f32.xlu0 %v1434
    %v1436 = vpop.xlane.xlu0 %1435
    %v1437 = vrcp.pop %v1433
    %v1438 = vmul.f32 %v1433, %v1437
    %v1439 = vsub.f32 1.0, %v1438
    %v1440 = vmul.f32 %v1437, %v1439
    %v1441 = vadd.f32 %v1437, %v1440
    %vm1442 = vweird.f32 %v1433
    %vm1443 = vweird.f32 %v1437
    %vm1444 = vmor %vm1442, %vm1443
    %v1445 = vsel %vm1444, %v1437, %v1441
    %v1446 = vand.u32 2147483647, %v1433
    %vm1447 = vcmp.eq.f32.partialorder %v1446, 8.507059e+37
    %v1448 = vand.u32 %v1433, 2147483648
    %v1449 = vor.u32 1.1754944e-38, %v1448
    %v1450 = vsel %vm1447, %v1449, %v1445
    %v1451 = vrcp.pop %v1436
    %v1452 = vmul.f32 %v1436, %v1451
    %v1453 = vsub.f32 1.0, %v1452
    %v1454 = vmul.f32 %v1451, %v1453
    %v1455 = vadd.f32 %v1451, %v1454
    %vm1456 = vweird.f32 %v1436
    %vm1457 = vweird.f32 %v1451
    %vm1458 = vmor %vm1456, %vm1457
    %v1459 = vsel %vm1458, %v1451, %v1455
    %v1460 = vand.u32 2147483647, %v1436
    %vm1461 = vcmp.eq.f32.partialorder %v1460, 8.507059e+37
    %v1462 = vand.u32 %v1436, 2147483648
    %v1463 = vor.u32 1.1754944e-38, %v1462
    %v1464 = vsel %vm1461, %v1463, %v1459
    %v1465 = vmul.f32 %v1428, %v1450
    %v1466 = vmul.f32 %v1430, %v1464
    %v1467 = vpack.c.bf16 %v1466, %v1465
    %1469 = vrot.lane.b32.xlu0 %v1296, 96
    %v1470 = vpop.permute.xlu0 %1469
    %v1473 = vsel %vm425, %v1467, 0
    %1475 = vmatpush.bf16.msra.mxu0 0
    %1476 = vmatpush.bf16.msra.mxu0 0
    %1477 = vmatpush.bf16.msra.mxu0 0
    %1478 = vmatpush.bf16.msra.mxu0 0
    %1479 = vmatpush.bf16.msra.mxu0 0
    %1480 = vmatpush.bf16.msra.mxu0 0
    %1481 = vmatpush.bf16.msra.mxu0 0
    %1482 = vmatpush.bf16.msra.mxu0 %v1470
    %1483 = vmatmul.bf16.gmra.mxu0 %v1473
    %v1484 = vpop.f32.mrf.mxu0
    %v1485 = vadd.f32 0.0, %v1484
    %v1486 = vpop.f32.mrf.mxu0
    %v1487 = vadd.f32 0.0, %v1486
    %1488 = vdwg.mxu0
    %v1489 = vpack.c.bf16 %v1487, %v1485
    %v1494 = vunpack.c.l.b16 %v1102
    %v1495 = vunpack.c.l.b16 %v1103
    %v1496 = vunpack.c.l.b16 %v1104
    %v1497 = vunpack.c.l.b16 %v1105
    %v1498 = vpack.c.b16 %v1495, %v1494
    %v1499 = vpack.c.b16 %v1497, %v1496
    %v1503 = vsel %vm400, %v1489, 0
    %1505 = vmatpush.bf16.msra.mxu0 0
    %1506 = vmatpush.bf16.msra.mxu0 0
    %1507 = vmatpush.bf16.msra.mxu0 0
    %1508 = vmatpush.bf16.msra.mxu0 0
    %1509 = vmatpush.bf16.msra.mxu0 0
    %1510 = vmatpush.bf16.msra.mxu0 0
    %1511 = vmatpush.bf16.msra.mxu0 %v1499
    %1512 = vmatpush.bf16.msra.mxu0 %v1498
    %1513 = vmatmul.bf16.gmra.mxu0 %v1503
    %v1514 = vpop.f32.mrf.mxu0
    %v1515 = vadd.f32 0.0, %v1514
    %v1516 = vpop.f32.mrf.mxu0
    %v1517 = vadd.f32 0.0, %v1516
    %1518 = vdwg.mxu0
    %v1523 = vunpack.c.l.b16 %v1098
    %v1524 = vunpack.c.l.b16 %v1099
    %v1525 = vunpack.c.l.b16 %v1100
    %v1526 = vunpack.c.l.b16 %v1101
    %v1527 = vpack.c.b16 %v1524, %v1523
    %v1528 = vpack.c.b16 %v1526, %v1525
    %v1532 = vsel %vm400, %v1390, 0
    %1534 = vmatpush.bf16.msra.mxu0 0
    %1535 = vmatpush.bf16.msra.mxu0 0
    %1536 = vmatpush.bf16.msra.mxu0 0
    %1537 = vmatpush.bf16.msra.mxu0 0
    %1538 = vmatpush.bf16.msra.mxu0 0
    %1539 = vmatpush.bf16.msra.mxu0 0
    %1540 = vmatpush.bf16.msra.mxu0 %v1528
    %1541 = vmatpush.bf16.msra.mxu0 %v1527
    %1542 = vmatmul.bf16.gmra.mxu0 %v1532
    %v1543 = vpop.f32.mrf.mxu0
    %v1544 = vadd.f32 %v1515, %v1543
    %v1545 = vpop.f32.mrf.mxu0
    %v1546 = vadd.f32 %v1517, %v1545
    %1547 = vdwg.mxu0
    %v1548 = vpack.c.bf16 %v1274, %v1272
    %v1549 = vpack.c.bf16 %v1293, %v1291
    %1551 = vrot.lane.b32.xlu0 %v1548, 64
    %v1552 = vpop.permute.xlu0 %1551
    %v1554 = vsel %vm400, %v1548, 0
    %v1557 = vsel %vm400, %v1552, 0
    %1559 = vmatpush.bf16.xpose.msra.mxu0 0
    %1560 = vmatpush.bf16.xpose.msra.mxu0 0
    %1561 = vmatpush.bf16.xpose.msra.mxu0 0
    %1562 = vmatpush.bf16.xpose.msra.mxu0 0
    %1563 = vmatpush.bf16.xpose.msra.mxu0 0
    %1564 = vmatpush.bf16.xpose.msra.mxu0 0
    %1565 = vmatpush.bf16.xpose.msra.mxu0 0
    %1566 = vmatpush.bf16.xpose.msra.mxu0 %v1557
    %1567 = vmatmul.bf16.gmra.mxu0 %v1554
    %v1568 = vpop.f32.mrf.mxu0
    %v1569 = vadd.f32 0.0, %v1568
    %v1570 = vpop.f32.mrf.mxu0
    %v1571 = vadd.f32 0.0, %v1570
    %1572 = vdwg.mxu0
    %v1573 = vmul.f32 %v1569, 0.17677669
    %v1574 = vmul.f32 %v1571, 0.17677669
    %v1575 = vadd.f32 %v1573, %v183
    %v1576 = vadd.f32 %v1574, %v183
    %v1577 = vsel %vm425, %v1575, -inf
    %1578 = vmax.xlane.f32.xlu0 %v1577
    %v1579 = vpop.xlane.xlu0 %1578
    %v1580 = vsel %vm425, %v1576, -inf
    %1581 = vmax.xlane.f32.xlu0 %v1580
    %v1582 = vpop.xlane.xlu0 %1581
    %v1583 = vsub.f32 %v1575, %v1579
    %v1584 = vsub.f32 %v1576, %v1582
    %v1585 = vmul.f32 %v1583, 1.442695
    %v1586 = vpow.pop %v1585
    %v1587 = vmul.f32 %v1584, 1.442695
    %v1588 = vpow.pop %v1587
    %v1589 = vsel %vm425, %v1586, 0.0
    %1590 = vadd.xlane.f32.xlu0 %v1589
    %v1591 = vpop.xlane.xlu0 %1590
    %v1592 = vsel %vm425, %v1588, 0.0
    %1593 = vadd.xlane.f32.xlu0 %v1592
    %v1594 = vpop.xlane.xlu0 %1593
    %v1595 = vrcp.pop %v1591
    %v1596 = vmul.f32 %v1591, %v1595
    %v1597 = vsub.f32 1.0, %v1596
    %v1598 = vmul.f32 %v1595, %v1597
    %v1599 = vadd.f32 %v1595, %v1598
    %vm1600 = vweird.f32 %v1591
    %vm1601 = vweird.f32 %v1595
    %vm1602 = vmor %vm1600, %vm1601
    %v1603 = vsel %vm1602, %v1595, %v1599
    %v1604 = vand.u32 2147483647, %v1591
    %vm1605 = vcmp.eq.f32.partialorder %v1604, 8.507059e+37
    %v1606 = vand.u32 %v1591, 2147483648
    %v1607 = vor.u32 1.1754944e-38, %v1606
    %v1608 = vsel %vm1605, %v1607, %v1603
    %v1609 = vrcp.pop %v1594
    %v1610 = vmul.f32 %v1594, %v1609
    %v1611 = vsub.f32 1.0, %v1610
    %v1612 = vmul.f32 %v1609, %v1611
    %v1613 = vadd.f32 %v1609, %v1612
    %vm1614 = vweird.f32 %v1594
    %vm1615 = vweird.f32 %v1609
    %vm1616 = vmor %vm1614, %vm1615
    %v1617 = vsel %vm1616, %v1609, %v1613
    %v1618 = vand.u32 2147483647, %v1594
    %vm1619 = vcmp.eq.f32.partialorder %v1618, 8.507059e+37
    %v1620 = vand.u32 %v1594, 2147483648
    %v1621 = vor.u32 1.1754944e-38, %v1620
    %v1622 = vsel %vm1619, %v1621, %v1617
    %v1623 = vmul.f32 %v1586, %v1608
    %v1624 = vmul.f32 %v1588, %v1622
    %v1625 = vpack.c.bf16 %v1624, %v1623
    %v1627 = vsel %vm425, %v1625, 0
    %1629 = vmatpush.bf16.msra.mxu0 0
    %1630 = vmatpush.bf16.msra.mxu0 0
    %1631 = vmatpush.bf16.msra.mxu0 0
    %1632 = vmatpush.bf16.msra.mxu0 0
    %1633 = vmatpush.bf16.msra.mxu0 0
    %1634 = vmatpush.bf16.msra.mxu0 0
    %1635 = vmatpush.bf16.msra.mxu0 0
    %1636 = vmatpush.bf16.msra.mxu0 %v1549
    %1637 = vmatmul.bf16.gmra.mxu0 %v1627
    %v1638 = vpop.f32.mrf.mxu0
    %v1639 = vadd.f32 0.0, %v1638
    %v1640 = vpop.f32.mrf.mxu0
    %v1641 = vadd.f32 0.0, %v1640
    %1642 = vdwg.mxu0
    %v1643 = vpack.c.bf16 %v1641, %v1639
    %1644 = vrot.lane.b32.xlu0 %v1548, 96
    %v1645 = vpop.permute.xlu0 %1644
    %1646 = vrot.lane.b32.xlu0 %v1548, 32
    %v1647 = vpop.permute.xlu0 %1646
    %v1649 = vsel %vm400, %v1645, 0
    %v1652 = vsel %vm400, %v1647, 0
    %1654 = vmatpush.bf16.xpose.msra.mxu0 0
    %1655 = vmatpush.bf16.xpose.msra.mxu0 0
    %1656 = vmatpush.bf16.xpose.msra.mxu0 0
    %1657 = vmatpush.bf16.xpose.msra.mxu0 0
    %1658 = vmatpush.bf16.xpose.msra.mxu0 0
    %1659 = vmatpush.bf16.xpose.msra.mxu0 0
    %1660 = vmatpush.bf16.xpose.msra.mxu0 0
    %1661 = vmatpush.bf16.xpose.msra.mxu0 %v1652
    %1662 = vmatmul.bf16.gmra.mxu0 %v1649
    %v1663 = vpop.f32.mrf.mxu0
    %v1664 = vadd.f32 0.0, %v1663
    %v1665 = vpop.f32.mrf.mxu0
    %v1666 = vadd.f32 0.0, %v1665
    %1667 = vdwg.mxu0
    %v1668 = vmul.f32 %v1664, 0.17677669
    %v1669 = vmul.f32 %v1666, 0.17677669
    %v1670 = vadd.f32 %v1668, %v183
    %v1671 = vadd.f32 %v1669, %v183
    %v1672 = vsel %vm425, %v1670, -inf
    %1673 = vmax.xlane.f32.xlu0 %v1672
    %v1674 = vpop.xlane.xlu0 %1673
    %v1675 = vsel %vm425, %v1671, -inf
    %1676 = vmax.xlane.f32.xlu0 %v1675
    %v1677 = vpop.xlane.xlu0 %1676
    %v1678 = vsub.f32 %v1670, %v1674
    %v1679 = vsub.f32 %v1671, %v1677
    %v1680 = vmul.f32 %v1678, 1.442695
    %v1681 = vpow.pop %v1680
    %v1682 = vmul.f32 %v1679, 1.442695
    %v1683 = vpow.pop %v1682
    %v1684 = vsel %vm425, %v1681, 0.0
    %1685 = vadd.xlane.f32.xlu0 %v1684
    %v1686 = vpop.xlane.xlu0 %1685
    %v1687 = vsel %vm425, %v1683, 0.0
    %1688 = vadd.xlane.f32.xlu0 %v1687
    %v1689 = vpop.xlane.xlu0 %1688
    %v1690 = vrcp.pop %v1686
    %v1691 = vmul.f32 %v1686, %v1690
    %v1692 = vsub.f32 1.0, %v1691
    %v1693 = vmul.f32 %v1690, %v1692
    %v1694 = vadd.f32 %v1690, %v1693
    %vm1695 = vweird.f32 %v1686
    %vm1696 = vweird.f32 %v1690
    %vm1697 = vmor %vm1695, %vm1696
    %v1698 = vsel %vm1697, %v1690, %v1694
    %v1699 = vand.u32 2147483647, %v1686
    %vm1700 = vcmp.eq.f32.partialorder %v1699, 8.507059e+37
    %v1701 = vand.u32 %v1686, 2147483648
    %v1702 = vor.u32 1.1754944e-38, %v1701
    %v1703 = vsel %vm1700, %v1702, %v1698
    %v1704 = vrcp.pop %v1689
    %v1705 = vmul.f32 %v1689, %v1704
    %v1706 = vsub.f32 1.0, %v1705
    %v1707 = vmul.f32 %v1704, %v1706
    %v1708 = vadd.f32 %v1704, %v1707
    %vm1709 = vweird.f32 %v1689
    %vm1710 = vweird.f32 %v1704
    %vm1711 = vmor %vm1709, %vm1710
    %v1712 = vsel %vm1711, %v1704, %v1708
    %v1713 = vand.u32 2147483647, %v1689
    %vm1714 = vcmp.eq.f32.partialorder %v1713, 8.507059e+37
    %v1715 = vand.u32 %v1689, 2147483648
    %v1716 = vor.u32 1.1754944e-38, %v1715
    %v1717 = vsel %vm1714, %v1716, %v1712
    %v1718 = vmul.f32 %v1681, %v1703
    %v1719 = vmul.f32 %v1683, %v1717
    %v1720 = vpack.c.bf16 %v1719, %v1718
    %1722 = vrot.lane.b32.xlu0 %v1549, 96
    %v1723 = vpop.permute.xlu0 %1722
    %v1726 = vsel %vm425, %v1720, 0
    %1728 = vmatpush.bf16.msra.mxu0 0
    %1729 = vmatpush.bf16.msra.mxu0 0
    %1730 = vmatpush.bf16.msra.mxu0 0
    %1731 = vmatpush.bf16.msra.mxu0 0
    %1732 = vmatpush.bf16.msra.mxu0 0
    %1733 = vmatpush.bf16.msra.mxu0 0
    %1734 = vmatpush.bf16.msra.mxu0 0
    %1735 = vmatpush.bf16.msra.mxu0 %v1723
    %1736 = vmatmul.bf16.gmra.mxu0 %v1726
    %v1737 = vpop.f32.mrf.mxu0
    %v1738 = vadd.f32 0.0, %v1737
    %v1739 = vpop.f32.mrf.mxu0
    %v1740 = vadd.f32 0.0, %v1739
    %1741 = vdwg.mxu0
    %v1742 = vpack.c.bf16 %v1740, %v1738
    %v1744 = vsel %vm400, %v1742, 0
    %1746 = vmatpush.bf16.msra.mxu0 0
    %1747 = vmatpush.bf16.msra.mxu0 0
    %1748 = vmatpush.bf16.msra.mxu0 0
    %1749 = vmatpush.bf16.msra.mxu0 0
    %1750 = vmatpush.bf16.msra.mxu0 0
    %1751 = vmatpush.bf16.msra.mxu0 0
    %1752 = vmatpush.bf16.msra.mxu0 %v1499
    %1753 = vmatpush.bf16.msra.mxu0 %v1498
    %1754 = vmatmul.bf16.gmra.mxu0 %v1744
    %v1755 = vpop.f32.mrf.mxu0
    %v1756 = vadd.f32 0.0, %v1755
    %v1757 = vpop.f32.mrf.mxu0
    %v1758 = vadd.f32 0.0, %v1757
    %1759 = vdwg.mxu0
    %v1761 = vsel %vm400, %v1643, 0
    %1763 = vmatpush.bf16.msra.mxu0 0
    %1764 = vmatpush.bf16.msra.mxu0 0
    %1765 = vmatpush.bf16.msra.mxu0 0
    %1766 = vmatpush.bf16.msra.mxu0 0
    %1767 = vmatpush.bf16.msra.mxu0 0
    %1768 = vmatpush.bf16.msra.mxu0 0
    %1769 = vmatpush.bf16.msra.mxu0 %v1528
    %1770 = vmatpush.bf16.msra.mxu0 %v1527
    %1771 = vmatmul.bf16.gmra.mxu0 %v1761
    %v1772 = vpop.f32.mrf.mxu0
    %v1773 = vadd.f32 %v1756, %v1772
    %v1774 = vpop.f32.mrf.mxu0
    %v1775 = vadd.f32 %v1758, %v1774
    %1776 = vdwg.mxu0
    %v1777 = vadd.f32 %v1082, %v1544
    %v1778 = vadd.f32 %v1083, %v1546
    %v1779 = vadd.f32 %v1084, %v1773
    %v1780 = vadd.f32 %v1085, %v1775
    %v1781 = vmul.f32 %v1777, %v1777
    %v1782 = vmul.f32 %v1778, %v1778
    %v1783 = vmul.f32 %v1779, %v1779
    %v1784 = vmul.f32 %v1780, %v1780
    %v1785 = vsel %vm230, %v1781, 0.0
    %1786 = vadd.xlane.f32.xlu0 %v1785
    %v1787 = vpop.xlane.xlu0 %1786
    %v1788 = vsel %vm230, %v1782, 0.0
    %1789 = vadd.xlane.f32.xlu0 %v1788
    %v1790 = vpop.xlane.xlu0 %1789
    %v1791 = vsel %vm230, %v1783, 0.0
    %1792 = vadd.xlane.f32.xlu0 %v1791
    %v1793 = vpop.xlane.xlu0 %1792
    %v1794 = vsel %vm230, %v1784, 0.0
    %1795 = vadd.xlane.f32.xlu0 %v1794
    %v1796 = vpop.xlane.xlu0 %1795
    %v1797 = vmul.f32 %v1787, %v249
    %v1798 = vmul.f32 %v1790, %v249
    %v1799 = vmul.f32 %v1793, %v249
    %v1800 = vmul.f32 %v1796, %v249
    %v1801 = vadd.f32 %v1797, 1e-06
    %v1802 = vadd.f32 %v1798, 1e-06
    %v1803 = vadd.f32 %v1799, 1e-06
    %v1804 = vadd.f32 %v1800, 1e-06
    %v1805 = vrsqrt.pop %v1801
    %v1806 = vmul.f32 %v1805, %v1801
    %v1807 = vmul.f32 %v1806, %v1805
    %v1808 = vmul.f32 0.5, %v1807
    %v1809 = vsub.f32 1.5, %v1808
    %v1810 = vmul.f32 %v1805, %v1809
    %vm1811 = vweird.f32 %v1801
    %vm1812 = vweird.f32 %v1805
    %vm1813 = vmor %vm1811, %vm1812
    %v1814 = vsel %vm1813, %v1805, %v1810
    %v1815 = vrsqrt.pop %v1802
    %v1816 = vmul.f32 %v1815, %v1802
    %v1817 = vmul.f32 %v1816, %v1815
    %v1818 = vmul.f32 0.5, %v1817
    %v1819 = vsub.f32 1.5, %v1818
    %v1820 = vmul.f32 %v1815, %v1819
    %vm1821 = vweird.f32 %v1802
    %vm1822 = vweird.f32 %v1815
    %vm1823 = vmor %vm1821, %vm1822
    %v1824 = vsel %vm1823, %v1815, %v1820
    %v1825 = vrsqrt.pop %v1803
    %v1826 = vmul.f32 %v1825, %v1803
    %v1827 = vmul.f32 %v1826, %v1825
    %v1828 = vmul.f32 0.5, %v1827
    %v1829 = vsub.f32 1.5, %v1828
    %v1830 = vmul.f32 %v1825, %v1829
    %vm1831 = vweird.f32 %v1803
    %vm1832 = vweird.f32 %v1825
    %vm1833 = vmor %vm1831, %vm1832
    %v1834 = vsel %vm1833, %v1825, %v1830
    %v1835 = vrsqrt.pop %v1804
    %v1836 = vmul.f32 %v1835, %v1804
    %v1837 = vmul.f32 %v1836, %v1835
    %v1838 = vmul.f32 0.5, %v1837
    %v1839 = vsub.f32 1.5, %v1838
    %v1840 = vmul.f32 %v1835, %v1839
    %vm1841 = vweird.f32 %v1804
    %vm1842 = vweird.f32 %v1835
    %vm1843 = vmor %vm1841, %vm1842
    %v1844 = vsel %vm1843, %v1835, %v1840
    %v1845 = vmul.f32 %v1777, %v1814
    %v1846 = vmul.f32 %v1778, %v1824
    %v1847 = vmul.f32 %v1779, %v1834
    %v1848 = vmul.f32 %v1780, %v1844
    %v1850 = vperm.slane %v1107, 0
    %v1852 = vmul.f32 %v1845, %v1850
    %v1853 = vmul.f32 %v1846, %v1850
    %v1854 = vmul.f32 %v1847, %v1850
    %v1855 = vmul.f32 %v1848, %v1850
    %v1856 = vpack.c.bf16 %v1853, %v1852
    %v1857 = vpack.c.bf16 %v1855, %v1854
    %v1866 = vunpack.c.l.b16 %v1109
    %v1867 = vunpack.c.l.b16 %v1110
    %v1868 = vunpack.c.l.b16 %v1111
    %v1869 = vunpack.c.l.b16 %v1112
    %v1870 = vunpack.c.l.b16 %v1113
    %v1871 = vunpack.c.l.b16 %v1114
    %v1872 = vunpack.c.l.b16 %v1115
    %v1873 = vunpack.c.l.b16 %v1116
    %v1874 = vpack.c.b16 %v1867, %v1866
    %v1875 = vpack.c.b16 %v1869, %v1868
    %v1876 = vpack.c.b16 %v1871, %v1870
    %v1877 = vpack.c.b16 %v1873, %v1872
    %v1883 = vsel %vm230, %v1856, 0
    %v1886 = vsel %vm230, %v1857, 0
    %1888 = vmatpush.bf16.msra.mxu0 0
    %1889 = vmatpush.bf16.msra.mxu0 0
    %1890 = vmatpush.bf16.msra.mxu0 0
    %1891 = vmatpush.bf16.msra.mxu0 0
    %1892 = vmatpush.bf16.msra.mxu0 %v1877
    %1893 = vmatpush.bf16.msra.mxu0 %v1876
    %1894 = vmatpush.bf16.msra.mxu0 %v1875
    %1895 = vmatpush.bf16.msra.mxu0 %v1874
    %1896 = vmatmul.bf16.gmra.mxu0 %v1883
    %v1897 = vpop.f32.mrf.mxu0
    %v1898 = vadd.f32 0.0, %v1897
    %v1899 = vpop.f32.mrf.mxu0
    %v1900 = vadd.f32 0.0, %v1899
    %1901 = vmatmul.bf16.gmra.mxu0 %v1886
    %v1902 = vpop.f32.mrf.mxu0
    %v1903 = vadd.f32 0.0, %v1902
    %v1904 = vpop.f32.mrf.mxu0
    %v1905 = vadd.f32 0.0, %v1904
    %1906 = vdwg.mxu0
    %v1907 = vmax.f32 %v1898, 0.0
    %v1908 = vmax.f32 %v1900, 0.0
    %v1909 = vmax.f32 %v1903, 0.0
    %v1910 = vmax.f32 %v1905, 0.0
    %v1911 = vpack.c.bf16 %v1908, %v1907
    %v1912 = vpack.c.bf16 %v1910, %v1909
    %v1929 = vunpack.c.l.b16 %v1118
    %v1930 = vunpack.c.l.b16 %v1119
    %v1931 = vunpack.c.l.b16 %v1120
    %v1932 = vunpack.c.l.b16 %v1121
    %v1933 = vunpack.c.l.b16 %v1122
    %v1934 = vunpack.c.l.b16 %v1123
    %v1935 = vunpack.c.l.b16 %v1124
    %v1936 = vunpack.c.l.b16 %v1125
    %v1937 = vunpack.c.l.b16 %v1126
    %v1938 = vunpack.c.l.b16 %v1127
    %v1939 = vunpack.c.l.b16 %v1128
    %v1940 = vunpack.c.l.b16 %v1129
    %v1941 = vunpack.c.l.b16 %v1130
    %v1942 = vunpack.c.l.b16 %v1131
    %v1943 = vunpack.c.l.b16 %v1132
    %v1944 = vunpack.c.l.b16 %v1133
    %v1945 = vpack.c.b16 %v1930, %v1929
    %v1946 = vpack.c.b16 %v1932, %v1931
    %v1947 = vpack.c.b16 %v1934, %v1933
    %v1948 = vpack.c.b16 %v1936, %v1935
    %v1949 = vpack.c.b16 %v1938, %v1937
    %v1950 = vpack.c.b16 %v1940, %v1939
    %v1951 = vpack.c.b16 %v1942, %v1941
    %v1952 = vpack.c.b16 %v1944, %v1943
    %1961 = vmatpush.bf16.msra.mxu0 %v1952
    %1962 = vmatpush.bf16.msra.mxu0 %v1951
    %1963 = vmatpush.bf16.msra.mxu0 %v1950
    %1964 = vmatpush.bf16.msra.mxu0 %v1949
    %1965 = vmatpush.bf16.msra.mxu0 %v1948
    %1966 = vmatpush.bf16.msra.mxu0 %v1947
    %1967 = vmatpush.bf16.msra.mxu0 %v1946
    %1968 = vmatpush.bf16.msra.mxu0 %v1945
    %1969 = vmatmul.bf16.gmra.mxu0 %v1911
    %v1970 = vpop.f32.mrf.mxu0
    %v1971 = vadd.f32 0.0, %v1970
    %v1972 = vpop.f32.mrf.mxu0
    %1973 = vmatmul.bf16.gmra.mxu0 %v1912
    %v1974 = vpop.f32.mrf.mxu0
    %v1975 = vadd.f32 0.0, %v1974
    %v1976 = vpop.f32.mrf.mxu0
    %1977 = vdwg.mxu0
    %v1978 = vadd.f32 %v1777, %v1971
    %v1979 = vadd.f32 %v1779, %v1975
    %v1981 = vrot.slane %v1979, 7
    %vm1983 = vcmask 1040384
    %v1984 = vsel %vm1983, %v1978, %v1981
    %v1985 = vld [vmem:[%s9] sm:$0x1]
    %v1986 = vmul.f32 %v1984, %v1984
    %vm1987 = vcmask 517120
    %v1988 = vsel %vm1987, %v1986, 0.0
    %1989 = vadd.xlane.f32.xlu0 %v1988
    %v1990 = vpop.xlane.xlu0 %1989
    %v1991 = vmul.f32 %v1990, %v249
    %v1992 = vadd.f32 %v1991, 1e-06
    %v1993 = vrsqrt.pop %v1992
    %v1994 = vmul.f32 %v1993, %v1992
    %v1995 = vmul.f32 %v1994, %v1993
    %v1996 = vmul.f32 0.5, %v1995
    %v1997 = vsub.f32 1.5, %v1996
    %v1998 = vmul.f32 %v1993, %v1997
    %vm1999 = vweird.f32 %v1992
    %vm2000 = vweird.f32 %v1993
    %vm2001 = vmor %vm1999, %vm2000
    %v2002 = vsel %vm2001, %v1993, %v1998
    %v2003 = vmul.f32 %v1984, %v2002
    %v2005 = vperm.slane %v1985, 0
    %v2007 = vmul.f32 %v2003, %v2005
    %v2008 = vpack.c.bf16 %v2007, %v2007
    %v2009 = vld [vmem:[%s10] sm:$0xff]
    %v2010 = vld [vmem:[%s10 + $0x8] sm:$0xff]
    %v2011 = vld [vmem:[%s10 + $0x10] sm:$0xff]
    %v2012 = vld [vmem:[%s10 + $0x18] sm:$0xff]
    %v2013 = vld [vmem:[%s10 + $0x20] sm:$0xff]
    %v2014 = vld [vmem:[%s10 + $0x28] sm:$0xff]
    %v2015 = vld [vmem:[%s10 + $0x30] sm:$0xff]
    %v2016 = vld [vmem:[%s10 + $0x38] sm:$0xff]
    %v2025 = vunpack.c.l.b16 %v2009
    %v2026 = vunpack.c.h.b16 %v2009
    %v2027 = vunpack.c.l.b16 %v2010
    %v2028 = vunpack.c.h.b16 %v2010
    %v2029 = vunpack.c.l.b16 %v2011
    %v2030 = vunpack.c.h.b16 %v2011
    %v2031 = vunpack.c.l.b16 %v2012
    %v2032 = vunpack.c.h.b16 %v2012
    %v2033 = vunpack.c.l.b16 %v2013
    %v2034 = vunpack.c.h.b16 %v2013
    %v2035 = vunpack.c.l.b16 %v2014
    %v2036 = vunpack.c.h.b16 %v2014
    %v2037 = vunpack.c.l.b16 %v2015
    %v2038 = vunpack.c.h.b16 %v2015
    %v2039 = vunpack.c.l.b16 %v2016
    %v2040 = vunpack.c.h.b16 %v2016
    %v2041 = vpack.c.b16 %v2027, %v2025
    %v2042 = vpack.c.b16 %v2028, %v2026
    %v2043 = vpack.c.b16 %v2031, %v2029
    %v2044 = vpack.c.b16 %v2032, %v2030
    %v2045 = vpack.c.b16 %v2035, %v2033
    %v2046 = vpack.c.b16 %v2036, %v2034
    %v2047 = vpack.c.b16 %v2039, %v2037
    %v2048 = vpack.c.b16 %v2040, %v2038
    %v2058 = vsel %vm230, %v2008, 0
    %2060 = vmatpush.bf16.msra.mxu0 0
    %2061 = vmatpush.bf16.msra.mxu0 0
    %2062 = vmatpush.bf16.msra.mxu0 0
    %2063 = vmatpush.bf16.msra.mxu0 0
    %2064 = vmatpush.bf16.msra.mxu0 %v2047
    %2065 = vmatpush.bf16.msra.mxu0 %v2045
    %2066 = vmatpush.bf16.msra.mxu0 %v2043
    %2067 = vmatpush.bf16.msra.mxu0 %v2041
    %2068 = vmatmul.bf16.gmra.mxu0 %v2058
    %v2069 = vpop.f32.mrf.mxu0
    %v2070 = vadd.f32 0.0, %v2069
    %v2071 = vpop.f32.mrf.mxu0
    %2072 = vdwg.mxu0
    %2073 = vmatpush.bf16.msra.mxu0 0
    %2074 = vmatpush.bf16.msra.mxu0 0
    %2075 = vmatpush.bf16.msra.mxu0 0
    %2076 = vmatpush.bf16.msra.mxu0 0
    %2077 = vmatpush.bf16.msra.mxu0 %v2048
    %2078 = vmatpush.bf16.msra.mxu0 %v2046
    %2079 = vmatpush.bf16.msra.mxu0 %v2044
    %2080 = vmatpush.bf16.msra.mxu0 %v2042
    %2081 = vmatmul.bf16.gmra.mxu0 %v2058
    %v2082 = vpop.f32.mrf.mxu0
    %v2083 = vadd.f32 0.0, %v2082
    %v2084 = vpop.f32.mrf.mxu0
    %2085 = vdwg.mxu0
    %v2086 = vmul.f32 %v2070, %v2070
    %v2087 = vmul.f32 %v2083, %v2083
    %vm2088 = vcmask 1041408
    %v2089 = vsel %vm2088, %v2086, 0.0
    %v2090 = vsel %vm2088, %v2087, 0.0
    %v2091 = vadd.f32 %v2089, %v2090
    %2092 = vadd.xlane.f32.xlu0 %v2091
    %v2093 = vpop.xlane.xlu0 %2092
    %v2094 = vmax.f32 %v2093, 1e-24
    %v2095 = vrsqrt.pop %v2094
    %v2096 = vmul.f32 %v2095, %v2094
    %v2097 = vmul.f32 %v2096, %v2095
    %v2098 = vmul.f32 0.5, %v2097
    %v2099 = vsub.f32 1.5, %v2098
    %v2100 = vmul.f32 %v2095, %v2099
    %vm2101 = vweird.f32 %v2094
    %vm2102 = vweird.f32 %v2095
    %vm2103 = vmor %vm2101, %vm2102
    %v2104 = vsel %vm2103, %v2095, %v2100
    %v2105 = vmul.f32 %v2070, %v2104
    %v2106 = vmul.f32 %v2083, %v2104
    %v2107 = vpack.c.bf16 %v2105, %v2105
    %v2108 = vpack.c.bf16 %v2106, %v2106
    %v2109 = vld [vmem:[%s11] sm:$0xf]
    %v2110 = vld [vmem:[%s11 + $0x4] sm:$0xf]
    %v2111 = vld [vmem:[%s11 + $0x8] sm:$0xf]
    %v2112 = vld [vmem:[%s11 + $0xc] sm:$0xf]
    %v2113 = vld [vmem:[%s11 + $0x10] sm:$0xf]
    %v2114 = vld [vmem:[%s11 + $0x14] sm:$0xf]
    %v2115 = vld [vmem:[%s11 + $0x18] sm:$0xf]
    %v2116 = vld [vmem:[%s11 + $0x1c] sm:$0xf]
    %v2117 = vld [vmem:[%s11 + $0x20] sm:$0xf]
    %v2118 = vld [vmem:[%s11 + $0x24] sm:$0xf]
    %v2119 = vld [vmem:[%s11 + $0x28] sm:$0xf]
    %v2120 = vld [vmem:[%s11 + $0x2c] sm:$0xf]
    %v2121 = vld [vmem:[%s11 + $0x30] sm:$0xf]
    %v2122 = vld [vmem:[%s11 + $0x34] sm:$0xf]
    %v2123 = vld [vmem:[%s11 + $0x38] sm:$0xf]
    %v2124 = vld [vmem:[%s11 + $0x3c] sm:$0xf]
    %v2125 = vld [vmem:[%s11 + $0x40] sm:$0xf]
    %v2126 = vld [vmem:[%s11 + $0x44] sm:$0xf]
    %v2127 = vld [vmem:[%s11 + $0x48] sm:$0xf]
    %v2128 = vld [vmem:[%s11 + $0x4c] sm:$0xf]
    %v2129 = vld [vmem:[%s11 + $0x50] sm:$0xf]
    %v2130 = vld [vmem:[%s11 + $0x54] sm:$0xf]
    %v2131 = vld [vmem:[%s11 + $0x58] sm:$0xf]
    %v2132 = vld [vmem:[%s11 + $0x5c] sm:$0xf]
    %v2133 = vld [vmem:[%s11 + $0x60] sm:$0xf]
    %v2134 = vld [vmem:[%s11 + $0x64] sm:$0xf]
    %v2135 = vld [vmem:[%s11 + $0x68] sm:$0xf]
    %v2136 = vld [vmem:[%s11 + $0x6c] sm:$0xf]
    %v2137 = vld [vmem:[%s11 + $0x70] sm:$0xf]
    %v2138 = vld [vmem:[%s11 + $0x74] sm:$0xf]
    %v2139 = vld [vmem:[%s11 + $0x78] sm:$0xf]
    %v2140 = vld [vmem:[%s11 + $0x7c] sm:$0xf]
    %v2141 = vld [vmem:[%s12] sm:$0x1]
    %v2143 = vperm.slane %v2141, 0
    %v2177 = vunpack.c.l.b16 %v2109
    %v2178 = vunpack.c.l.b16 %v2110
    %v2179 = vunpack.c.l.b16 %v2111
    %v2180 = vunpack.c.l.b16 %v2112
    %v2181 = vunpack.c.l.b16 %v2113
    %v2182 = vunpack.c.l.b16 %v2114
    %v2183 = vunpack.c.l.b16 %v2115
    %v2184 = vunpack.c.l.b16 %v2116
    %v2185 = vunpack.c.l.b16 %v2117
    %v2186 = vunpack.c.l.b16 %v2118
    %v2187 = vunpack.c.l.b16 %v2119
    %v2188 = vunpack.c.l.b16 %v2120
    %v2189 = vunpack.c.l.b16 %v2121
    %v2190 = vunpack.c.l.b16 %v2122
    %v2191 = vunpack.c.l.b16 %v2123
    %v2192 = vunpack.c.l.b16 %v2124
    %v2193 = vunpack.c.l.b16 %v2125
    %v2194 = vunpack.c.l.b16 %v2126
    %v2195 = vunpack.c.l.b16 %v2127
    %v2196 = vunpack.c.l.b16 %v2128
    %v2197 = vunpack.c.l.b16 %v2129
    %v2198 = vunpack.c.l.b16 %v2130
    %v2199 = vunpack.c.l.b16 %v2131
    %v2200 = vunpack.c.l.b16 %v2132
    %v2201 = vunpack.c.l.b16 %v2133
    %v2202 = vunpack.c.l.b16 %v2134
    %v2203 = vunpack.c.l.b16 %v2135
    %v2204 = vunpack.c.l.b16 %v2136
    %v2205 = vunpack.c.l.b16 %v2137
    %v2206 = vunpack.c.l.b16 %v2138
    %v2207 = vunpack.c.l.b16 %v2139
    %v2208 = vunpack.c.l.b16 %v2140
    %v2209 = vpack.c.b16 %v2178, %v2177
    %v2210 = vpack.c.b16 %v2180, %v2179
    %v2211 = vpack.c.b16 %v2182, %v2181
    %v2212 = vpack.c.b16 %v2184, %v2183
    %v2213 = vpack.c.b16 %v2186, %v2185
    %v2214 = vpack.c.b16 %v2188, %v2187
    %v2215 = vpack.c.b16 %v2190, %v2189
    %v2216 = vpack.c.b16 %v2192, %v2191
    %v2217 = vpack.c.b16 %v2194, %v2193
    %v2218 = vpack.c.b16 %v2196, %v2195
    %v2219 = vpack.c.b16 %v2198, %v2197
    %v2220 = vpack.c.b16 %v2200, %v2199
    %v2221 = vpack.c.b16 %v2202, %v2201
    %v2222 = vpack.c.b16 %v2204, %v2203
    %v2223 = vpack.c.b16 %v2206, %v2205
    %v2224 = vpack.c.b16 %v2208, %v2207
    %2241 = vmatpush.bf16.msra.mxu0 %v2216
    %2242 = vmatpush.bf16.msra.mxu0 %v2215
    %2243 = vmatpush.bf16.msra.mxu0 %v2214
    %2244 = vmatpush.bf16.msra.mxu0 %v2213
    %2245 = vmatpush.bf16.msra.mxu0 %v2212
    %2246 = vmatpush.bf16.msra.mxu0 %v2211
    %2247 = vmatpush.bf16.msra.mxu0 %v2210
    %2248 = vmatpush.bf16.msra.mxu0 %v2209
    %2249 = vmatmul.bf16.gmra.mxu0 %v2107
    %v2250 = vpop.f32.mrf.mxu0
    %v2251 = vadd.f32 %v2143, %v2250
    %v2252 = vpop.f32.mrf.mxu0
    %2253 = vdwg.mxu0
    %2254 = vmatpush.bf16.msra.mxu0 %v2224
    %2255 = vmatpush.bf16.msra.mxu0 %v2223
    %2256 = vmatpush.bf16.msra.mxu0 %v2222
    %2257 = vmatpush.bf16.msra.mxu0 %v2221
    %2258 = vmatpush.bf16.msra.mxu0 %v2220
    %2259 = vmatpush.bf16.msra.mxu0 %v2219
    %2260 = vmatpush.bf16.msra.mxu0 %v2218
    %2261 = vmatpush.bf16.msra.mxu0 %v2217
    %2262 = vmatmul.bf16.gmra.mxu0 %v2108
    %v2263 = vpop.f32.mrf.mxu0
    %v2264 = vadd.f32 %v2251, %v2263
    %v2265 = vpop.f32.mrf.mxu0
    %2266 = vdwg.mxu0
    %2267 = vst [vmem:[#allocation2] sm:$0x3] %v2264
    // Predicated region
    $region54: #{codet5p_forward.1} parent=1 // pred_check
      _
    $region55: #{codet5p_forward.1} parent=1 // pred_check_branch
      %2269 = sbr.rel (0) target = $region57
    $region56: #{codet5p_forward.1} parent=1 // pred_region
      %2271 = vsyncadd [#allocation3], 0
      %s2273 = sshll.u32 [#allocation2], 4
      %s2274 = int_to_ptr.vmem [resolvable:$true] %s2273
      %s2275 = sshll.u32 %s13, 4
      %s2276 = int_to_ptr.hbm [resolvable:$true] %s2275
      %2278 = dma.vmem_to_hbm [thread:$0]  %s2274, 32, %s2276, [#allocation3]
    $region57: #{codet5p_forward.1} parent=1 // pred_fallthru
      _
    // Predicated region
    $region58: #{codet5p_forward.1} parent=1 // pred_check
      _
    $region59: #{codet5p_forward.1} parent=1 // pred_check_branch
      %2280 = sbr.rel (0) target = $region61
    $region60: #{codet5p_forward.1} parent=1 // pred_region
      %2282 = dma.done [#allocation3], 32
    $region61: #{codet5p_forward.1} parent=1 // pred_fallthru
      _
    %2283 = vsyncpa [#allocation3], 1

</llo_original>
